<compile_context>
chip_gen: v7x
topology: tpu7x:2x2x1
jax: 0.10.0
libtpu: 0.0.40
codegen_flags: <defaults>
</compile_context>

<pallas_src>
import functools

import numpy as np
import jax
import jax.numpy as jnp
from jax.experimental import pallas as pl
from jax.experimental.pallas import tpu as pltpu


# ---------------------------------------------------------------------------
# helpers
# ---------------------------------------------------------------------------
def _round_up(x, m):
    return ((x + m - 1) // m) * m


def _padded_width(w):
    # Stored activation width: valid cols [0, w), >= 1 trailing zero column,
    # rounded to the bf16 sublane tile (16) so in-kernel reshapes are free and
    # ky-slices of the flattened window are sublane aligned.
    return max(16, _round_up(w + 1, 16))


@functools.lru_cache(maxsize=None)
def _vmem_limit():
    # Per-generation VMEM budget: big tiles on v5e/v6e (128 MiB), conservative
    # on v7x (64 MiB).
    try:
        cap = getattr(pltpu.get_tpu_info(), "vmem_capacity_bytes",
                      64 * 1024 * 1024)
    except Exception:
        cap = 64 * 1024 * 1024
    return int(min(cap * 3 // 4, 112 * 1024 * 1024))


def _cparams(dims):
    return pltpu.CompilerParams(dimension_semantics=dims,
                                vmem_limit_bytes=_vmem_limit())


# ---------------------------------------------------------------------------
# 3x3 conv + bias + ReLU  (flat window, kx-folded K=3*Cin MXU matmuls)
# ---------------------------------------------------------------------------
def _conv3x3_relu_kernel(top_ref, x_ref, bot_ref, w_ref, b_ref, o_ref,
                         win_ref, xk_ref, acc_ref, *, w_true):
    # top/bot_ref: (1, Wp, Cin) bf16 -- image rows i*th-1 / i*th+th (clamped)
    # x_ref      : (th, Wp, Cin) bf16 -- image rows [i*th, i*th+th)
    # w_ref      : (3, 3*Cin, Cout) bf16 -- tap (ky,kx) at rows kx*Cin:(kx+1)*Cin
    # b_ref      : (1, Cout) f32
    # o_ref      : (th, Wp, Cout) bf16 (column-padded output)
    th, Wp, Cin = x_ref.shape
    Cout = o_ref.shape[-1]
    Lm = (th + 2) * Wp
    i = pl.program_id(1)
    nt = pl.num_programs(1)

    zrow = jnp.zeros((Wp, Cin), jnp.bfloat16)
    top = top_ref[...].reshape(Wp, Cin) * (i > 0).astype(jnp.bfloat16)
    bot = bot_ref[...].reshape(Wp, Cin) * (i < nt - 1).astype(jnp.bfloat16)

    # Flattened (row-major) window: [zeros | top halo | tile rows | bot halo | zeros]
    win_ref[pl.ds(0, Wp), :] = zrow
    win_ref[pl.ds(Wp, Wp), :] = top
    win_ref[pl.ds(2 * Wp, th * Wp), :] = x_ref[...].reshape(th * Wp, Cin)
    win_ref[pl.ds((th + 2) * Wp, Wp), :] = bot
    win_ref[pl.ds((th + 3) * Wp, Wp), :] = zrow

    # kx-fold staging: xk[:, kx*Cin:(kx+1)*Cin] = window shifted by (kx-1) cols.
    # Each ky tap then becomes ONE aligned slice + ONE matmul with K = 3*Cin.
    for kx in range(3):
        xk_ref[:, kx * Cin:(kx + 1) * Cin] = win_ref[pl.ds(Wp - 1 + kx, Lm), :]

    acc_ref[...] = jnp.dot(xk_ref[pl.ds(0, th * Wp), :], w_ref[0],
                           preferred_element_type=jnp.float32)
    for ky in (1, 2):
        acc_ref[...] += jnp.dot(xk_ref[pl.ds(ky * Wp, th * Wp), :], w_ref[ky],
                                preferred_element_type=jnp.float32)

    out = jnp.maximum(acc_ref[...] + b_ref[...], 0.0).astype(o_ref.dtype)
    out = out.reshape(th, Wp, Cout)
    col = jax.lax.broadcasted_iota(jnp.int32, (th, Wp, 1), 1)
    # Zero the pad columns so the output is directly consumable by the next conv.
    o_ref[...] = jnp.where(col < w_true, out, jnp.zeros_like(out))


def _pick_rows_conv(H, Wp, Cin, Cout):
    budget = int(_vmem_limit() * 0.45)
    best = 1
    for th in range(1, H + 1):
        if H % th:
            continue
        need = (2 * th * Wp * Cin * 2          # main input block (double buffered)
                + 8 * Wp * Cin                 # halo rows
                + (th + 4) * Wp * Cin * 2      # window scratch
                + (th + 2) * Wp * 3 * Cin * 2  # kx-folded staging scratch
                + th * Wp * Cout * 4           # f32 accumulator
                + 2 * th * Wp * Cout * 2       # output block (double buffered)
                + 2 * 9 * Cin * Cout * 2)      # weights
        if need <= budget:
            best = th
    return best


def conv3x3_relu(x, w_fold, b, w_true, *, rows=None):
    """3x3 'same' conv + bias + ReLU on the column-padded NHWC activation.

    x: (N, H, Wp, Cin) bf16 (valid cols [0, w_true), zeros elsewhere)
    w_fold: (3, 3*Cin, Cout) bf16, b: (1, Cout) f32
    -> (N, H, Wp, Cout) bf16 in the same padded format (no jnp.pad needed).
    """
    N, H, Wp, Cin = x.shape
    Cout = w_fold.shape[-1]
    th = rows if rows is not None else _pick_rows_conv(H, Wp, Cin, Cout)
    assert H % th == 0
    nt = H // th
    kern = functools.partial(_conv3x3_relu_kernel, w_true=w_true)
    return pl.pallas_call(
        kern,
        out_shape=jax.ShapeDtypeStruct((N, H, Wp, Cout), jnp.bfloat16),
        grid=(N, nt),
        in_specs=[
            pl.BlockSpec((None, 1, Wp, Cin),
                         lambda n, i: (n, jnp.maximum(i * th - 1, 0), 0, 0)),
            pl.BlockSpec((None, th, Wp, Cin), lambda n, i: (n, i, 0, 0)),
            pl.BlockSpec((None, 1, Wp, Cin),
                         lambda n, i: (n, jnp.minimum((i + 1) * th, H - 1), 0, 0)),
            pl.BlockSpec((3, 3 * Cin, Cout), lambda n, i: (0, 0, 0)),
            pl.BlockSpec((1, Cout), lambda n, i: (0, 0)),
        ],
        out_specs=pl.BlockSpec((None, th, Wp, Cout), lambda n, i: (n, i, 0, 0)),
        scratch_shapes=[
            pltpu.VMEM(((th + 4) * Wp, Cin), jnp.bfloat16),
            pltpu.VMEM(((th + 2) * Wp, 3 * Cin), jnp.bfloat16),
            pltpu.VMEM((th * Wp, Cout), jnp.float32),
        ],
        compiler_params=_cparams(("parallel", "parallel")),
    )(x, x, x, w_fold, b)


# ---------------------------------------------------------------------------
# MaxPool2d(kernel=2, stride=2) on the column-padded format
# ---------------------------------------------------------------------------
def _maxpool2x2_kernel(x_ref, o_ref, *, wp_out):
    # x_ref: (tho, 2, Whalf, 2*C)   o_ref: (tho, wp_out, C)
    C = o_ref.shape[-1]
    y = x_ref[...]
    r = jnp.maximum(y[:, 0], y[:, 1])            # max over the row pair
    m = jnp.maximum(r[..., :C], r[..., C:])      # max over the col pair (lanes)
    tho, Whalf, _ = m.shape
    if wp_out <= Whalf:
        o_ref[...] = m[:, :wp_out, :]
    else:
        o_ref[...] = jnp.concatenate(
            [m, jnp.zeros((tho, wp_out - Whalf, C), m.dtype)], axis=1)


def _pick_rows_pool(Ho, Whalf, C, wp_out):
    budget = int(_vmem_limit() * 0.4)
    best = 1
    for t in range(1, Ho + 1):
        if Ho % t:
            continue
        need = (2 * t * 2 * Whalf * 2 * C * 2 + 2 * t * wp_out * C * 2
                + t * Whalf * 2 * C * 2)
        if need <= budget:
            best = t
    return best


def maxpool2x2(x, w_true):
    """MaxPool2d(2,2). x: (N, H, Wp, C) padded-col bf16 -> ((N, H/2, Wp', C), W/2)."""
    N, H, Wp, C = x.shape
    # TODO(synk): PyTorch MaxPool2d(2,2) floor-divides odd sizes; only even here.
    assert H % 2 == 0 and w_true % 2 == 0
    Ho, Wo = H // 2, w_true // 2
    Whalf = Wp // 2
    wp_out = _padded_width(Wo)
    xr = x.reshape(N, Ho, 2, Whalf, 2 * C)       # free reshape: col pairs -> lanes
    tho = _pick_rows_pool(Ho, Whalf, C, wp_out)
    nt = Ho // tho
    kern = functools.partial(_maxpool2x2_kernel, wp_out=wp_out)
    out = pl.pallas_call(
        kern,
        out_shape=jax.ShapeDtypeStruct((N, Ho, wp_out, C), x.dtype),
        grid=(N, nt),
        in_specs=[pl.BlockSpec((None, tho, 2, Whalf, 2 * C),
                               lambda n, i: (n, i, 0, 0, 0))],
        out_specs=pl.BlockSpec((None, tho, wp_out, C), lambda n, i: (n, i, 0, 0)),
        compiler_params=_cparams(("parallel", "parallel")),
    )(xr)
    return out, Wo


# ---------------------------------------------------------------------------
# LPIPS tail: normalize + (diff)^2 + 1x1 lin conv + spatial sum, fused
# ---------------------------------------------------------------------------
def _lpips_tail_kernel(f0_ref, f1_ref, w_ref, o_ref, acc_ref):
    i = pl.program_id(1)

    @pl.when(i == 0)
    def _():
        acc_ref[...] = jnp.zeros_like(acc_ref)

    f0 = f0_ref[...].astype(jnp.float32)         # (th, Wp, C); pad cols are 0
    f1 = f1_ref[...].astype(jnp.float32)
    # eps placement matches normalize_tensor: x / (sqrt(sum(x^2)) + 1e-10)
    inv0 = pl.reciprocal(jnp.sqrt(jnp.sum(f0 * f0, -1, keepdims=True)) + 1e-10,
                         approx=True)
    inv1 = pl.reciprocal(jnp.sqrt(jnp.sum(f1 * f1, -1, keepdims=True)) + 1e-10,
                         approx=True)
    d = (f0 * inv0 - f1 * inv1) ** 2
    w = w_ref[...].reshape(1, 1, -1)
    s = jnp.sum(d * w, axis=-1)                  # pad columns contribute exactly 0
    acc_ref[...] += jnp.sum(s, keepdims=True)

    @pl.when(i == pl.num_programs(1) - 1)
    def _():
        o_ref[...] = jnp.broadcast_to(acc_ref[...], o_ref.shape)


def _pick_rows_tail(H, Wp, C):
    budget = int(_vmem_limit() * 0.4)
    best = 1
    for t in range(1, H + 1):
        if H % t:
            continue
        need = 2 * 2 * t * Wp * C * 2 + 4 * t * Wp * C * 4
        if need <= budget:
            best = t
    return best


def lpips_layer_distance(f0, f1, w_lin, w_true):
    """Fused per-layer LPIPS term -> (N,) f32 (spatial mean already applied)."""
    N, H, Wp, C = f0.shape
    th = _pick_rows_tail(H, Wp, C)
    nt = H // th
    fspec = pl.BlockSpec((None, th, Wp, C), lambda n, i: (n, i, 0, 0))
    out = pl.pallas_call(
        _lpips_tail_kernel,
        out_shape=jax.ShapeDtypeStruct((N, 1, 128), jnp.float32),
        grid=(N, nt),
        in_specs=[fspec, fspec, pl.BlockSpec((1, C), lambda n, i: (0, 0))],
        out_specs=pl.BlockSpec((None, 1, 128), lambda n, i: (n, 0, 0)),
        scratch_shapes=[pltpu.VMEM((1, 1), jnp.float32)],
        compiler_params=_cparams(("parallel", "arbitrary")),
    )(f0, f1, w_lin)
    return out[:, 0, 0] / float(H * w_true)


# ---------------------------------------------------------------------------
# VGG16 / LPIPS model glue
# ---------------------------------------------------------------------------
_VGG_CFG = [
    (3, 64), (64, 64),                         # slice1 -> relu1_2
    (64, 128), (128, 128),                     # slice2 -> relu2_2
    (128, 256), (256, 256), (256, 256),        # slice3 -> relu3_3
    (256, 512), (512, 512), (512, 512),        # slice4 -> relu4_3
    (512, 512), (512, 512), (512, 512),        # slice5 -> relu5_3
]
_SLICE_LAYOUT = [2, 2, 3, 3, 3]
_LPIPS_CHNS = [64, 128, 256, 512, 512]

# ScalingLayer buffers (from the reference PyTorch module).
_SHIFT = np.array([-0.030, -0.088, -0.188], np.float32)
_SCALE = np.array([0.458, 0.448, 0.450], np.float32)


def init_lpips_params(key):
    vgg = []
    for cin, cout in _VGG_CFG:
        key, kw, kb = jax.random.split(key, 3)
        std = (2.0 / (9 * cin)) ** 0.5          # He init
        w = jax.random.normal(kw, (3, 3, cin, cout), jnp.float32) * std
        b = jax.random.normal(kb, (cout,), jnp.float32) * 0.01
        vgg.append((w.reshape(3, 3 * cin, cout).astype(jnp.bfloat16),
                    b.reshape(1, cout)))
    lins = []
    for c in _LPIPS_CHNS:
        key, kw = jax.random.split(key)
        lins.append(jnp.abs(jax.random.normal(kw, (1, c), jnp.float32)) / c)
    return {"vgg": vgg, "lin": lins}


def _preprocess(x_nchw):
    # NCHW -> NHWC, ScalingLayer, column-padded format, bf16 (cheap: 3 channels).
    x = jnp.transpose(x_nchw, (0, 2, 3, 1)).astype(jnp.float32)
    x = (x - _SHIFT) / _SCALE
    N, H, W, C = x.shape
    Wp = _padded_width(W)
    x = jnp.pad(x, ((0, 0), (0, 0), (0, Wp - W), (0, 0)))
    return x.astype(jnp.bfloat16), W


def vgg16_features(x, w_true, vgg_params):
    feats = []
    h, w = x, w_true
    li = 0
    for si, n_conv in enumerate(_SLICE_LAYOUT):
        if si > 0:
            h, w = maxpool2x2(h, w)
        for _ in range(n_conv):
            wf, b = vgg_params[li]
            h = conv3x3_relu(h, wf, b, w)
            li += 1
        feats.append((h, w))
    return feats


def lpips_forward(input_nchw, target_nchw, params):
    """LPIPS(input, target) -> (N, 1, 1, 1) float32."""
    x0, w0 = _preprocess(input_nchw)
    x1, _ = _preprocess(target_nchw)
    feats0 = vgg16_features(x0, w0, params["vgg"])
    feats1 = vgg16_features(x1, w0, params["vgg"])
    val = None
    for (f0, wt), (f1, _), w_lin in zip(feats0, feats1, params["lin"]):
        d = lpips_layer_distance(f0, f1, w_lin, wt)      # (N,)
        val = d if val is None else val + d
    return val.reshape(-1, 1, 1, 1)


# ---------------------------------------------------------------------------
# Pure-XLA f32 reference (structural end-to-end check)
# ---------------------------------------------------------------------------
def _lpips_reference_f32(x_nchw, y_nchw, params):
    def pre(x):
        x = jnp.transpose(x, (0, 2, 3, 1)).astype(jnp.float32)
        x = (x - _SHIFT) / _SCALE
        return x.astype(jnp.bfloat16).astype(jnp.float32)

    def feats(h):
        outs, li = [], 0
        for si, n_conv in enumerate(_SLICE_LAYOUT):
            if si > 0:
                h = jax.lax.reduce_window(h, -jnp.inf, jax.lax.max,
                                          (1, 2, 2, 1), (1, 2, 2, 1), "VALID")
            for _ in range(n_conv):
                wf, b = params["vgg"][li]
                li += 1
                cin = wf.shape[1] // 3
                w = wf.astype(jnp.float32).reshape(3, 3, cin, wf.shape[-1])
                h = jax.lax.conv_general_dilated(
                    h, w, (1, 1), "SAME",
                    dimension_numbers=("NHWC", "HWIO", "NHWC"))
                h = jnp.maximum(h + b.reshape(1, 1, 1, -1), 0.0)
            outs.append(h)
        return outs

    f0s, f1s = feats(pre(x_nchw)), feats(pre(y_nchw))
    val = 0.0
    for f0, f1, wl in zip(f0s, f1s, params["lin"]):
        n0 = f0 / (jnp.sqrt(jnp.sum(f0 * f0, -1, keepdims=True)) + 1e-10)
        n1 = f1 / (jnp.sqrt(jnp.sum(f1 * f1, -1, keepdims=True)) + 1e-10)
        v = jnp.sum((n0 - n1) ** 2 * wl.reshape(1, 1, 1, -1), -1)
        val = val + jnp.mean(v, axis=(1, 2))
    return val                                            # (N,)


# ---------------------------------------------------------------------------
if __name__ == "__main__":
    key = jax.random.PRNGKey(0)
    k0, k1, kp = jax.random.split(key, 3)

    # --- single-conv check vs XLA (multi row-tile: exercises halos/boundaries).
    kc0, kc1 = jax.random.split(jax.random.PRNGKey(1))
    Ht, Wt, Ci, Co = 12, 20, 8, 32
    xc = jax.random.normal(kc0, (1, Ht, Wt, Ci), jnp.float32)
    wc = jax.random.normal(kc1, (3, 3, Ci, Co), jnp.float32) * 0.1
    bc = jnp.linspace(-0.5, 0.5, Co, dtype=jnp.float32).reshape(1, Co)
    Wpt = _padded_width(Wt)
    xcp = jnp.pad(xc, ((0, 0), (0, 0), (0, Wpt - Wt), (0, 0))).astype(jnp.bfloat16)
    wfold = wc.reshape(3, 3 * Ci, Co).astype(jnp.bfloat16)
    got = conv3x3_relu(xcp, wfold, bc, Wt, rows=4)[:, :, :Wt, :].astype(jnp.float32)
    ref = jax.lax.conv_general_dilated(
        xcp[:, :, :Wt, :].astype(jnp.float32),
        wfold.astype(jnp.float32).reshape(3, 3, Ci, Co),
        (1, 1), "SAME", dimension_numbers=("NHWC", "HWIO", "NHWC"))
    ref = jnp.maximum(ref + bc.reshape(1, 1, 1, Co), 0.0)
    assert jnp.allclose(got, ref, atol=3e-2, rtol=3e-2), \
        float(jnp.max(jnp.abs(got - ref)))

    # --- maxpool check.
    xm = jax.random.normal(jax.random.PRNGKey(2), (1, 8, 6, 16), jnp.float32)
    Wpm = _padded_width(6)
    xmp = jnp.pad(xm, ((0, 0), (0, 0), (0, Wpm - 6), (0, 0))).astype(jnp.bfloat16)
    pooled, wo = maxpool2x2(xmp, 6)
    assert wo == 3
    xmv = xmp[:, :, :6, :].astype(jnp.float32)
    ref_pool = xmv.reshape(1, 4, 2, 3, 2, 16).max(axis=(2, 4))
    assert jnp.allclose(pooled[:, :, :3, :].astype(jnp.float32), ref_pool,
                        atol=1e-6, rtol=1e-6)

    # --- full LPIPS forward on small NCHW inputs.
    x = jax.random.normal(k0, (2, 3, 16, 16), jnp.float32)
    y = jax.random.normal(k1, (2, 3, 16, 16), jnp.float32)
    params = init_lpips_params(kp)

    fwd = jax.jit(lpips_forward)
    val = fwd(x, y, params)
    jax.block_until_ready(val)
    assert val.shape == (2, 1, 1, 1), val.shape
    assert bool(jnp.all(jnp.isfinite(val)))

    # Structural end-to-end check against a pure-XLA f32 reference (bf16
    # activation rounding is the only intended difference -> loose tolerance).
    ref_val = jax.jit(_lpips_reference_f32)(x, y, params)
    jax.block_until_ready(ref_val)
    assert jnp.allclose(val[:, 0, 0, 0], ref_val, rtol=0.25, atol=1e-2), \
        (np.asarray(val[:, 0, 0, 0]), np.asarray(ref_val))

    # Identical inputs -> bitwise-identical features -> exactly zero distance.
    val0 = fwd(x, x, params)
    jax.block_until_ready(val0)
    assert bool(jnp.all(jnp.abs(val0) < 1e-6)), val0

    print("KERNEL_OK")
</pallas_src>

<mosaic_0001>
module attributes {stable_mosaic.version = 11 : i64} {
  func.func @_conv3x3_relu_kernel(%arg0: i32, %arg1: i32, %arg2: memref<1x1x32x8xbf16, #tpu.memory_space<vmem>>, %arg3: memref<1x4x32x8xbf16, #tpu.memory_space<vmem>>, %arg4: memref<1x1x32x8xbf16, #tpu.memory_space<vmem>>, %arg5: memref<3x24x32xbf16, #tpu.memory_space<vmem>>, %arg6: memref<1x32xf32, #tpu.memory_space<vmem>>, %arg7: memref<1x4x32x32xbf16, #tpu.memory_space<vmem>>, %arg8: memref<256x8xbf16, #tpu.memory_space<vmem>>, %arg9: memref<192x24xbf16, #tpu.memory_space<vmem>>, %arg10: memref<128x32xf32, #tpu.memory_space<vmem>>) attributes {dimension_semantics = [#tpu.dimension_semantics<parallel>, #tpu.dimension_semantics<parallel>], iteration_bounds = array<i64: 1, 3>, scalar_prefetch = 0 : i64, scratch_operands = 3 : i64, tpu.core_type = #tpu.core_type<tc>, window_params = [{transform_indices = @transform_0, window_bounds = array<i64: 1, 1, 32, 8>}, {transform_indices = @transform_1, window_bounds = array<i64: 1, 4, 32, 8>}, {transform_indices = @transform_2, window_bounds = array<i64: 1, 1, 32, 8>}, {pipeline_mode = #tpu.pipeline_mode<synchronous>, transform_indices = @transform_3, window_bounds = array<i64: 3, 24, 32>}, {pipeline_mode = #tpu.pipeline_mode<synchronous>, transform_indices = @transform_4, window_bounds = array<i64: 1, 32>}, {transform_indices = @transform_5, window_bounds = array<i64: 1, 4, 32, 32>}]} {
    %cst = arith.constant 0.000000e+00 : bf16
    %0 = vector.broadcast %cst : bf16 to vector<32x8xbf16>
    %c0 = arith.constant 0 : index
    %c0_0 = arith.constant 0 : index
    %c0_1 = arith.constant 0 : index
    %c0_2 = arith.constant 0 : index
    %1 = vector.load %arg2[%c0, %c0_0, %c0_1, %c0_2] : memref<1x1x32x8xbf16, #tpu.memory_space<vmem>>, vector<1x1x32x8xbf16>
    %2 = vector.shape_cast %1 : vector<1x1x32x8xbf16> to vector<1x32x8xbf16>
    %3 = vector.shape_cast %2 : vector<1x32x8xbf16> to vector<32x8xbf16>
    %c0_i32 = arith.constant 0 : i32
    %4 = arith.cmpi sgt, %arg1, %c0_i32 : i32
    %5 = arith.extui %4 : i1 to i32
    %6 = arith.sitofp %5 : i32 to f32
    %7 = arith.truncf %6 : f32 to bf16
    %8 = vector.broadcast %7 : bf16 to vector<32x8xbf16>
    %9 = arith.mulf %3, %8 : vector<32x8xbf16>
    %c0_3 = arith.constant 0 : index
    %c0_4 = arith.constant 0 : index
    %c0_5 = arith.constant 0 : index
    %c0_6 = arith.constant 0 : index
    %10 = vector.load %arg4[%c0_3, %c0_4, %c0_5, %c0_6] : memref<1x1x32x8xbf16, #tpu.memory_space<vmem>>, vector<1x1x32x8xbf16>
    %11 = vector.shape_cast %10 : vector<1x1x32x8xbf16> to vector<1x32x8xbf16>
    %12 = vector.shape_cast %11 : vector<1x32x8xbf16> to vector<32x8xbf16>
    %c2_i32 = arith.constant 2 : i32
    %13 = arith.cmpi slt, %arg1, %c2_i32 : i32
    %14 = arith.extui %13 : i1 to i32
    %15 = arith.sitofp %14 : i32 to f32
    %16 = arith.truncf %15 : f32 to bf16
    %17 = vector.broadcast %16 : bf16 to vector<32x8xbf16>
    %18 = arith.mulf %12, %17 : vector<32x8xbf16>
    %c0_7 = arith.constant 0 : index
    %c0_8 = arith.constant 0 : index
    %19 = vector.load %arg8[%c0_7, %c0_8] : memref<256x8xbf16, #tpu.memory_space<vmem>>, vector<32x8xbf16>
    tpu.vector_store %arg8[%c0_7, %c0_8], %0 {strides = array<i32>} : memref<256x8xbf16, #tpu.memory_space<vmem>>, vector<32x8xbf16>,
    %c32 = arith.constant 32 : index
    %c0_9 = arith.constant 0 : index
    %20 = vector.load %arg8[%c32, %c0_9] : memref<256x8xbf16, #tpu.memory_space<vmem>>, vector<32x8xbf16>
    tpu.vector_store %arg8[%c32, %c0_9], %9 {strides = array<i32>} : memref<256x8xbf16, #tpu.memory_space<vmem>>, vector<32x8xbf16>,
    %c0_10 = arith.constant 0 : index
    %c0_11 = arith.constant 0 : index
    %c0_12 = arith.constant 0 : index
    %c0_13 = arith.constant 0 : index
    %21 = vector.load %arg3[%c0_10, %c0_11, %c0_12, %c0_13] : memref<1x4x32x8xbf16, #tpu.memory_space<vmem>>, vector<1x4x32x8xbf16>
    %22 = vector.shape_cast %21 : vector<1x4x32x8xbf16> to vector<4x32x8xbf16>
    %23 = vector.shape_cast %22 : vector<4x32x8xbf16> to vector<128x8xbf16>
    %c64 = arith.constant 64 : index
    %c0_14 = arith.constant 0 : index
    %24 = vector.load %arg8[%c64, %c0_14] : memref<256x8xbf16, #tpu.memory_space<vmem>>, vector<128x8xbf16>
    tpu.vector_store %arg8[%c64, %c0_14], %23 {strides = array<i32>} : memref<256x8xbf16, #tpu.memory_space<vmem>>, vector<128x8xbf16>,
    %c192 = arith.constant 192 : index
    %c0_15 = arith.constant 0 : index
    %25 = vector.load %arg8[%c192, %c0_15] : memref<256x8xbf16, #tpu.memory_space<vmem>>, vector<32x8xbf16>
    tpu.vector_store %arg8[%c192, %c0_15], %18 {strides = array<i32>} : memref<256x8xbf16, #tpu.memory_space<vmem>>, vector<32x8xbf16>,
    %c224 = arith.constant 224 : index
    %c0_16 = arith.constant 0 : index
    %26 = vector.load %arg8[%c224, %c0_16] : memref<256x8xbf16, #tpu.memory_space<vmem>>, vector<32x8xbf16>
    tpu.vector_store %arg8[%c224, %c0_16], %0 {strides = array<i32>} : memref<256x8xbf16, #tpu.memory_space<vmem>>, vector<32x8xbf16>,
    %c31 = arith.constant 31 : index
    %c0_17 = arith.constant 0 : index
    %27 = vector.load %arg8[%c31, %c0_17] : memref<256x8xbf16, #tpu.memory_space<vmem>>, vector<192x8xbf16>
    %c0_18 = arith.constant 0 : index
    %c0_19 = arith.constant 0 : index
    %28 = vector.load %arg9[%c0_18, %c0_19] : memref<192x24xbf16, #tpu.memory_space<vmem>>, vector<192x8xbf16>
    tpu.vector_store %arg9[%c0_18, %c0_19], %27 {strides = array<i32>} : memref<192x24xbf16, #tpu.memory_space<vmem>>, vector<192x8xbf16>,
    %c32_20 = arith.constant 32 : index
    %c0_21 = arith.constant 0 : index
    %29 = vector.load %arg8[%c32_20, %c0_21] : memref<256x8xbf16, #tpu.memory_space<vmem>>, vector<192x8xbf16>
    %c0_22 = arith.constant 0 : index
    %c8 = arith.constant 8 : index
    %30 = vector.load %arg9[%c0_22, %c8] : memref<192x24xbf16, #tpu.memory_space<vmem>>, vector<192x8xbf16>
    tpu.vector_store %arg9[%c0_22, %c8], %29 {strides = array<i32>} : memref<192x24xbf16, #tpu.memory_space<vmem>>, vector<192x8xbf16>,
    %c33 = arith.constant 33 : index
    %c0_23 = arith.constant 0 : index
    %31 = vector.load %arg8[%c33, %c0_23] : memref<256x8xbf16, #tpu.memory_space<vmem>>, vector<192x8xbf16>
    %c0_24 = arith.constant 0 : index
    %c16 = arith.constant 16 : index
    %32 = vector.load %arg9[%c0_24, %c16] : memref<192x24xbf16, #tpu.memory_space<vmem>>, vector<192x8xbf16>
    tpu.vector_store %arg9[%c0_24, %c16], %31 {strides = array<i32>} : memref<192x24xbf16, #tpu.memory_space<vmem>>, vector<192x8xbf16>,
    %c0_25 = arith.constant 0 : index
    %c0_26 = arith.constant 0 : index
    %33 = vector.load %arg9[%c0_25, %c0_26] : memref<192x24xbf16, #tpu.memory_space<vmem>>, vector<128x24xbf16>
    %c0_27 = arith.constant 0 : index
    %c0_28 = arith.constant 0 : index
    %c0_29 = arith.constant 0 : index
    %34 = vector.load %arg5[%c0_27, %c0_28, %c0_29] : memref<3x24x32xbf16, #tpu.memory_space<vmem>>, vector<1x24x32xbf16>
    %35 = vector.shape_cast %34 : vector<1x24x32xbf16> to vector<24x32xbf16>
    %cst_30 = arith.constant dense<0.000000e+00> : vector<128x32xf32>
    %36 = tpu.matmul %33, %35, %cst_30 {dimension_numbers = #tpu.dot_dimension_numbers<[1], [0], [0], [1], [0, 0, 1, 1], [], []>} : vector<128x24xbf16>, vector<24x32xbf16>, vector<128x32xf32> -> vector<128x32xf32>
    %c0_31 = arith.constant 0 : index
    %c0_32 = arith.constant 0 : index
    %37 = vector.load %arg10[%c0_31, %c0_32] : memref<128x32xf32, #tpu.memory_space<vmem>>, vector<128x32xf32>
    tpu.vector_store %arg10[%c0_31, %c0_32], %36 {strides = array<i32>} : memref<128x32xf32, #tpu.memory_space<vmem>>, vector<128x32xf32>,
    %c0_33 = arith.constant 0 : index
    %c0_34 = arith.constant 0 : index
    %38 = vector.load %arg10[%c0_33, %c0_34] : memref<128x32xf32, #tpu.memory_space<vmem>>, vector<128x32xf32>
    %c32_35 = arith.constant 32 : index
    %c0_36 = arith.constant 0 : index
    %39 = vector.load %arg9[%c32_35, %c0_36] : memref<192x24xbf16, #tpu.memory_space<vmem>>, vector<128x24xbf16>
    %c1 = arith.constant 1 : index
    %c0_37 = arith.constant 0 : index
    %c0_38 = arith.constant 0 : index
    %40 = vector.load %arg5[%c1, %c0_37, %c0_38] : memref<3x24x32xbf16, #tpu.memory_space<vmem>>, vector<1x24x32xbf16>
    %41 = vector.shape_cast %40 : vector<1x24x32xbf16> to vector<24x32xbf16>
    %cst_39 = arith.constant dense<0.000000e+00> : vector<128x32xf32>
    %42 = tpu.matmul %39, %41, %cst_39 {dimension_numbers = #tpu.dot_dimension_numbers<[1], [0], [0], [1], [0, 0, 1, 1], [], []>} : vector<128x24xbf16>, vector<24x32xbf16>, vector<128x32xf32> -> vector<128x32xf32>
    %43 = arith.addf %38, %42 : vector<128x32xf32>
    %c0_40 = arith.constant 0 : index
    %c0_41 = arith.constant 0 : index
    %44 = vector.load %arg10[%c0_40, %c0_41] : memref<128x32xf32, #tpu.memory_space<vmem>>, vector<128x32xf32>
    tpu.vector_store %arg10[%c0_40, %c0_41], %43 {strides = array<i32>} : memref<128x32xf32, #tpu.memory_space<vmem>>, vector<128x32xf32>,
    %c0_42 = arith.constant 0 : index
    %c0_43 = arith.constant 0 : index
    %45 = vector.load %arg10[%c0_42, %c0_43] : memref<128x32xf32, #tpu.memory_space<vmem>>, vector<128x32xf32>
    %c64_44 = arith.constant 64 : index
    %c0_45 = arith.constant 0 : index
    %46 = vector.load %arg9[%c64_44, %c0_45] : memref<192x24xbf16, #tpu.memory_space<vmem>>, vector<128x24xbf16>
    %c2 = arith.constant 2 : index
    %c0_46 = arith.constant 0 : index
    %c0_47 = arith.constant 0 : index
    %47 = vector.load %arg5[%c2, %c0_46, %c0_47] : memref<3x24x32xbf16, #tpu.memory_space<vmem>>, vector<1x24x32xbf16>
    %48 = vector.shape_cast %47 : vector<1x24x32xbf16> to vector<24x32xbf16>
    %cst_48 = arith.constant dense<0.000000e+00> : vector<128x32xf32>
    %49 = tpu.matmul %46, %48, %cst_48 {dimension_numbers = #tpu.dot_dimension_numbers<[1], [0], [0], [1], [0, 0, 1, 1], [], []>} : vector<128x24xbf16>, vector<24x32xbf16>, vector<128x32xf32> -> vector<128x32xf32>
    %50 = arith.addf %45, %49 : vector<128x32xf32>
    %c0_49 = arith.constant 0 : index
    %c0_50 = arith.constant 0 : index
    %51 = vector.load %arg10[%c0_49, %c0_50] : memref<128x32xf32, #tpu.memory_space<vmem>>, vector<128x32xf32>
    tpu.vector_store %arg10[%c0_49, %c0_50], %50 {strides = array<i32>} : memref<128x32xf32, #tpu.memory_space<vmem>>, vector<128x32xf32>,
    %c0_51 = arith.constant 0 : index
    %c0_52 = arith.constant 0 : index
    %52 = vector.load %arg10[%c0_51, %c0_52] : memref<128x32xf32, #tpu.memory_space<vmem>>, vector<128x32xf32>
    %c0_53 = arith.constant 0 : index
    %c0_54 = arith.constant 0 : index
    %53 = vector.load %arg6[%c0_53, %c0_54] : memref<1x32xf32, #tpu.memory_space<vmem>>, vector<1x32xf32>
    %54 = vector.broadcast %53 : vector<1x32xf32> to vector<128x32xf32>
    %55 = arith.addf %52, %54 : vector<128x32xf32>
    %cst_55 = arith.constant 0.000000e+00 : f32
    %56 = vector.broadcast %cst_55 : f32 to vector<128x32xf32>
    %57 = arith.maximumf %55, %56 : vector<128x32xf32>
    %58 = arith.truncf %57 : vector<128x32xf32> to vector<128x32xbf16>
    %59 = vector.shape_cast %58 : vector<128x32xbf16> to vector<4x32x32xbf16>
    %60 = tpu.iota {dimensions = array<i32: 1>} : vector<4x32x1xi32>
    %c20_i32 = arith.constant 20 : i32
    %61 = vector.broadcast %c20_i32 : i32 to vector<4x32x1xi32>
    %62 = arith.cmpi slt, %60, %61 : vector<4x32x1xi32>
    %cst_56 = arith.constant 0.000000e+00 : bf16
    %63 = vector.broadcast %cst_56 : bf16 to vector<4x32x32xbf16>
    %64 = vector.shape_cast %62 : vector<4x32x1xi1> to vector<4x32x1xi1>
    %65 = vector.broadcast %64 : vector<4x32x1xi1> to vector<4x32x32xi1>
    %66 = arith.select %65, %59, %63 : vector<4x32x32xi1>, vector<4x32x32xbf16>
    %c0_57 = arith.constant 0 : index
    %c0_58 = arith.constant 0 : index
    %c0_59 = arith.constant 0 : index
    %c0_60 = arith.constant 0 : index
    %67 = vector.load %arg7[%c0_57, %c0_58, %c0_59, %c0_60] : memref<1x4x32x32xbf16, #tpu.memory_space<vmem>>, vector<1x4x32x32xbf16>
    %68 = vector.shape_cast %67 : vector<1x4x32x32xbf16> to vector<4x32x32xbf16>
    %69 = vector.shape_cast %66 : vector<4x32x32xbf16> to vector<1x4x32x32xbf16>
    tpu.vector_store %arg7[%c0_57, %c0_58, %c0_59, %c0_60], %69 {strides = array<i32>} : memref<1x4x32x32xbf16, #tpu.memory_space<vmem>>, vector<1x4x32x32xbf16>,
    return
  }
  func.func @transform_0(%arg0: i32, %arg1: i32) -> (i32, i32, i32, i32) {
    %c4_i32 = arith.constant 4 : i32
    %0 = arith.muli %arg1, %c4_i32 : i32
    %c1_i32 = arith.constant 1 : i32
    %1 = arith.subi %0, %c1_i32 : i32
    %c0_i32 = arith.constant 0 : i32
    %2 = arith.maxsi %1, %c0_i32 : i32
    %c0_i32_0 = arith.constant 0 : i32
    %c0_i32_1 = arith.constant 0 : i32
    %c0_i32_2 = arith.constant 0 : i32
    return %arg0, %2, %c0_i32_0, %c0_i32_1 : i32, i32, i32, i32
  }
  func.func @transform_1(%arg0: i32, %arg1: i32) -> (i32, i32, i32, i32) {
    %c0_i32 = arith.constant 0 : i32
    %c0_i32_0 = arith.constant 0 : i32
    %c0_i32_1 = arith.constant 0 : i32
    return %arg0, %arg1, %c0_i32, %c0_i32_0 : i32, i32, i32, i32
  }
  func.func @transform_2(%arg0: i32, %arg1: i32) -> (i32, i32, i32, i32) {
    %c1_i32 = arith.constant 1 : i32
    %0 = arith.addi %arg1, %c1_i32 : i32
    %c4_i32 = arith.constant 4 : i32
    %1 = arith.muli %0, %c4_i32 : i32
    %c11_i32 = arith.constant 11 : i32
    %2 = arith.minsi %1, %c11_i32 : i32
    %c0_i32 = arith.constant 0 : i32
    %c0_i32_0 = arith.constant 0 : i32
    %c0_i32_1 = arith.constant 0 : i32
    return %arg0, %2, %c0_i32, %c0_i32_0 : i32, i32, i32, i32
  }
  func.func @transform_3(%arg0: i32, %arg1: i32) -> (i32, i32, i32) {
    %c0_i32 = arith.constant 0 : i32
    %c0_i32_0 = arith.constant 0 : i32
    %c0_i32_1 = arith.constant 0 : i32
    %c0_i32_2 = arith.constant 0 : i32
    return %c0_i32, %c0_i32_0, %c0_i32_1 : i32, i32, i32
  }
  func.func @transform_4(%arg0: i32, %arg1: i32) -> (i32, i32) {
    %c0_i32 = arith.constant 0 : i32
    %c0_i32_0 = arith.constant 0 : i32
    %c0_i32_1 = arith.constant 0 : i32
    return %c0_i32, %c0_i32_0 : i32, i32
  }
  func.func @transform_5(%arg0: i32, %arg1: i32) -> (i32, i32, i32, i32) {
    %c0_i32 = arith.constant 0 : i32
    %c0_i32_0 = arith.constant 0 : i32
    %c0_i32_1 = arith.constant 0 : i32
    return %arg0, %arg1, %c0_i32, %c0_i32_0 : i32, i32, i32, i32
  }
}

</mosaic_0001>

<llo_original>
// kernel: tpu_custom_call.1
$region0: #{tpu_custom_call.1}
  #allocation0 [shape = 'u32[]', space=smem, size = 0x4, offset = 0x4, fixed_abs, tag = 'smem constant byte address 0x4 - core index']
  #allocation1 [shape = 'u32[144,128]{1,0:T(1,128)}', space=vmem, size = 0x12000, scoped, tag = 'internal scratch']
  #allocation2 [shape = 'bf16[256,8]{1,0:T(16,128)(2,1)}', space=vmem, size = 0x10000, scoped, tag = 'scratch operand']
  #allocation3 [shape = 'bf16[192,24]{1,0:T(16,128)(2,1)}', space=vmem, size = 0xc000, scoped, tag = 'scratch operand']
  #allocation4 [shape = 'f32[128,32]{1,0:T(8,128)}', space=vmem, size = 0x10000, scoped, tag = 'scratch operand']
  %s0 = inlined_call_operand.vmem [shape: bf16[1,12,32,8], index: 0, kind: input, shape index: {}]
  %s1 = inlined_call_operand.vmem [shape: bf16[1,12,32,8], index: 1, kind: input, shape index: {}]
  %s2 = inlined_call_operand.vmem [shape: bf16[1,12,32,8], index: 2, kind: input, shape index: {}]
  %s3 = inlined_call_operand.vmem [shape: bf16[3,24,32], index: 3, kind: input, shape index: {}]
  %s4 = inlined_call_operand.vmem [shape: f32[1,32], index: 4, kind: input, shape index: {}]
  %s5 = inlined_call_operand.hbm [shape: bf16[1,12,32,32], index: 5, kind: output, shape index: {}]
  %s6 = sld [smem:[#allocation0]]
  $region53: #{tpu_custom_call.1} parent=0
    _
  %s8 = ssub.s32 1, %s6
  %s9 = scalar_select 0, %s8, %s6
  $region1: #{tpu_custom_call.1} parent=0
    #allocation5 [shape = 'u8[65536]{0}', space=vmem, size = 0x10000, scoped, tag = 'output window, operand 0']
    #allocation6 [shape = 's32[2]{0}', space=sflag, size = 0x8, scoped, tag = 'scoped memory for tpu_custom_call.1']
    %10 = vsyncpa [#allocation6], 0
    %s11 = scalar_lea.sflag [#allocation6], 1
    %12 = vsyncpa %s11, 0
    loop: start=0, step=1, limit=5
    $region2: #{tpu_custom_call.1} parent=1 // loop_pre_header
      _
    $region3: #{tpu_custom_call.1} parent=1 // loop_header
      %s14 = sphi 0, %s18
      %p15 = scmp.ge.s32.totalorder %s14, 5
      %s21 = sphi 0, %s33
      %s22 = sphi 0, %s29
      %s23 = sphi 0, %s21
      %s24 = sphi 0, %s22
      %s25 = sphi 0, %s23
      %s26 = sphi 0, %s24
      %s46 = sphi 0, %s48
      %s49 = sphi 0, %s46
      %s50 = sphi 0, %s49
      %s66 = sphi 0, %s50
      %s74 = sphi 0, %s76
      %s77 = sphi 0, %s74
      %s78 = sphi 0, %s77
      %s94 = sphi 0, %s78
      %s110 = sphi 0, %s112
      %s113 = sphi 0, %s110
      %s114 = sphi 0, %s113
      %s130 = sphi 0, %s114
      %s134 = sphi 0, %s134
      %s136 = sphi 0, %s134
      %s137 = sphi 0, %s136
      %s151 = sphi 0, %s137
      %s155 = sphi 0, %s155
      %s157 = sphi 0, %s155
      %s158 = sphi 0, %s157
      %s172 = sphi 0, %s158
      %s180 = sphi 0, %s182
      %s183 = sphi 0, %s180
      %s184 = sphi 0, %s183
      %s200 = sphi 0, %s184
    $region4: #{tpu_custom_call.1} parent=1 // loop_header_branch
      %17 = sbr.rel (%p15) target = $region8
    $region5: #{tpu_custom_call.1} parent=1 // loop_body
      %s19 = ssub.s32 %s14, 1
      %s20 = ssub.s32 %s14, 2
      %s27 = sadd.s32 1, %s22
      %p28 = scmp.ge.s32.totalorder %s27, 3
      %s29 = scalar_select %p28, 0, %s27
      %s30 = sadd.s32 1, %s21
      %s31 = scalar_select %p28, %s30, %s21
      %p32 = scmp.ge.s32.totalorder %s31, 1
      %s33 = scalar_select %p32, 0, %s31
      %s34 = smul.u32 %s22, 4
      %s35 = ssub.s32 %s34, 1
      %p36 = scmp.gt.s32.totalorder %s35, 0
      %s37 = scalar_select %p36, %s35, 0
      %s38 = smul.u32 %s29, 4
      %s39 = ssub.s32 %s38, 1
      %p40 = scmp.gt.s32.totalorder %s39, 0
      %s41 = scalar_select %p40, %s39, 0
      %s42 = ssub.s32 %s21, %s33
      %s43 = ssub.s32 %s37, %s41
      %s44 = sor.u32 %s42, %s43
      %p45 = scmp.eq.s32.totalorder %s44, 0
      %s47 = sadd.s32 %s46, 1
      %s48 = scalar_select %p45, %s46, %s47
      %p51 = pneg %p45
      %p52 = scmp.eq.s32.totalorder %s14, 2
      %p53 = por %p51, %p52
      %p54 = scmp.ne.s32.totalorder %s46, %s49
      %p55 = scmp.eq.s32.totalorder %s14, 0
      %p56 = por %p54, %p55
      %p57 = scmp.ne.s32.totalorder %s46, %s49
      %p58 = scmp.eq.s32.totalorder %s19, 2
      %p59 = por %p57, %p58
      %p60 = scmp.ne.s32.totalorder %s49, %s50
      %p61 = scmp.eq.s32.totalorder %s19, 0
      %p62 = por %p60, %p61
      %p63 = scmp.ne.s32.totalorder %s49, %s50
      %p64 = scmp.eq.s32.totalorder %s20, 2
      %p65 = por %p63, %p64
      %p67 = scmp.ne.s32.totalorder %s50, %s66
      %p68 = scmp.eq.s32.totalorder %s20, 0
      %p69 = por %p67, %p68
      %s70 = ssub.s32 %s21, %s33
      %s71 = ssub.s32 %s22, %s29
      %s72 = sor.u32 %s70, %s71
      %p73 = scmp.eq.s32.totalorder %s72, 0
      %s75 = sadd.s32 %s74, 1
      %s76 = scalar_select %p73, %s74, %s75
      %p79 = pneg %p73
      %p80 = scmp.eq.s32.totalorder %s14, 2
      %p81 = por %p79, %p80
      %p82 = scmp.ne.s32.totalorder %s74, %s77
      %p83 = scmp.eq.s32.totalorder %s14, 0
      %p84 = por %p82, %p83
      %p85 = scmp.ne.s32.totalorder %s74, %s77
      %p86 = scmp.eq.s32.totalorder %s19, 2
      %p87 = por %p85, %p86
      %p88 = scmp.ne.s32.totalorder %s77, %s78
      %p89 = scmp.eq.s32.totalorder %s19, 0
      %p90 = por %p88, %p89
      %p91 = scmp.ne.s32.totalorder %s77, %s78
      %p92 = scmp.eq.s32.totalorder %s20, 2
      %p93 = por %p91, %p92
      %p95 = scmp.ne.s32.totalorder %s78, %s94
      %p96 = scmp.eq.s32.totalorder %s20, 0
      %p97 = por %p95, %p96
      %s98 = sadd.s32 %s22, 1
      %s99 = smul.u32 %s98, 4
      %p100 = scmp.lt.s32.totalorder %s99, 11
      %s101 = scalar_select %p100, %s99, 11
      %s102 = sadd.s32 %s29, 1
      %s103 = smul.u32 %s102, 4
      %p104 = scmp.lt.s32.totalorder %s103, 11
      %s105 = scalar_select %p104, %s103, 11
      %s106 = ssub.s32 %s21, %s33
      %s107 = ssub.s32 %s101, %s105
      %s108 = sor.u32 %s106, %s107
      %p109 = scmp.eq.s32.totalorder %s108, 0
      %s111 = sadd.s32 %s110, 1
      %s112 = scalar_select %p109, %s110, %s111
      %p115 = pneg %p109
      %p116 = scmp.eq.s32.totalorder %s14, 2
      %p117 = por %p115, %p116
      %p118 = scmp.ne.s32.totalorder %s110, %s113
      %p119 = scmp.eq.s32.totalorder %s14, 0
      %p120 = por %p118, %p119
      %p121 = scmp.ne.s32.totalorder %s110, %s113
      %p122 = scmp.eq.s32.totalorder %s19, 2
      %p123 = por %p121, %p122
      %p124 = scmp.ne.s32.totalorder %s113, %s114
      %p125 = scmp.eq.s32.totalorder %s19, 0
      %p126 = por %p124, %p125
      %p127 = scmp.ne.s32.totalorder %s113, %s114
      %p128 = scmp.eq.s32.totalorder %s20, 2
      %p129 = por %p127, %p128
      %p131 = scmp.ne.s32.totalorder %s114, %s130
      %p132 = scmp.eq.s32.totalorder %s20, 0
      %p133 = por %p131, %p132
      %s135 = sadd.s32 %s134, 1
      %p138 = scmp.eq.s32.totalorder %s14, 2
      %p139 = scmp.ne.s32.totalorder %s134, %s136
      %p140 = scmp.eq.s32.totalorder %s14, 0
      %p141 = por %p139, %p140
      %p142 = scmp.ne.s32.totalorder %s134, %s136
      %p143 = scmp.eq.s32.totalorder %s19, 2
      %p144 = por %p142, %p143
      %p145 = scmp.ne.s32.totalorder %s136, %s137
      %p146 = scmp.eq.s32.totalorder %s19, 0
      %p147 = por %p145, %p146
      %p148 = scmp.ne.s32.totalorder %s136, %s137
      %p149 = scmp.eq.s32.totalorder %s20, 2
      %p150 = por %p148, %p149
      %p152 = scmp.ne.s32.totalorder %s137, %s151
      %p153 = scmp.eq.s32.totalorder %s20, 0
      %p154 = por %p152, %p153
      %s156 = sadd.s32 %s155, 1
      %p159 = scmp.eq.s32.totalorder %s14, 2
      %p160 = scmp.ne.s32.totalorder %s155, %s157
      %p161 = scmp.eq.s32.totalorder %s14, 0
      %p162 = por %p160, %p161
      %p163 = scmp.ne.s32.totalorder %s155, %s157
      %p164 = scmp.eq.s32.totalorder %s19, 2
      %p165 = por %p163, %p164
      %p166 = scmp.ne.s32.totalorder %s157, %s158
      %p167 = scmp.eq.s32.totalorder %s19, 0
      %p168 = por %p166, %p167
      %p169 = scmp.ne.s32.totalorder %s157, %s158
      %p170 = scmp.eq.s32.totalorder %s20, 2
      %p171 = por %p169, %p170
      %p173 = scmp.ne.s32.totalorder %s158, %s172
      %p174 = scmp.eq.s32.totalorder %s20, 0
      %p175 = por %p173, %p174
      %s176 = ssub.s32 %s21, %s33
      %s177 = ssub.s32 %s22, %s29
      %s178 = sor.u32 %s176, %s177
      %p179 = scmp.eq.s32.totalorder %s178, 0
      %s181 = sadd.s32 %s180, 1
      %s182 = scalar_select %p179, %s180, %s181
      %p185 = pneg %p179
      %p186 = scmp.eq.s32.totalorder %s14, 2
      %p187 = por %p185, %p186
      %p188 = scmp.ne.s32.totalorder %s180, %s183
      %p189 = scmp.eq.s32.totalorder %s14, 0
      %p190 = por %p188, %p189
      %p191 = scmp.ne.s32.totalorder %s180, %s183
      %p192 = scmp.eq.s32.totalorder %s19, 2
      %p193 = por %p191, %p192
      %p194 = scmp.ne.s32.totalorder %s183, %s184
      %p195 = scmp.eq.s32.totalorder %s19, 0
      %p196 = por %p194, %p195
      %p197 = scmp.ne.s32.totalorder %s183, %s184
      %p198 = scmp.eq.s32.totalorder %s20, 2
      %p199 = por %p197, %p198
      %p201 = scmp.ne.s32.totalorder %s184, %s200
      %p202 = scmp.eq.s32.totalorder %s20, 0
      %p203 = por %p201, %p202
      %p204 = scmp.le.s32.totalorder 1, %s14
      %p205 = scmp.lt.s32.totalorder %s14, 4
      %p206 = pnand %p204, %p205
      %p207 = pneg %p206
      // Predicated region
      $region9: #{tpu_custom_call.1} parent=5 // pred_check
        _
      $region10: #{tpu_custom_call.1} parent=5 // pred_check_branch
        %209 = sbr.rel (%p206) target = $region12
      $region11: #{tpu_custom_call.1} parent=5 // pred_region
        %s210 = ssub.s32 %s14, 1
        // Predicated region
        $region13: #{tpu_custom_call.1} parent=11 // pred_check
          %p211 = pneg %p147
        $region14: #{tpu_custom_call.1} parent=11 // pred_check_branch
          %213 = sbr.rel (%p211) target = $region16
        $region15: #{tpu_custom_call.1} parent=11 // pred_region
          _
        $region16: #{tpu_custom_call.1} parent=11 // pred_fallthru
          _
        // Predicated region
        $region17: #{tpu_custom_call.1} parent=11 // pred_check
          %p214 = pneg %p168
        $region18: #{tpu_custom_call.1} parent=11 // pred_check_branch
          %216 = sbr.rel (%p214) target = $region20
        $region19: #{tpu_custom_call.1} parent=11 // pred_region
          _
        $region20: #{tpu_custom_call.1} parent=11 // pred_fallthru
          _
      $region12: #{tpu_custom_call.1} parent=5 // pred_fallthru
        _
      %p217 = scmp.lt.s32.totalorder %s14, 3
      // Predicated region
      $region21: #{tpu_custom_call.1} parent=5 // pred_check
        %p218 = pneg %p217
      $region22: #{tpu_custom_call.1} parent=5 // pred_check_branch
        %220 = sbr.rel (%p218) target = $region24
      $region23: #{tpu_custom_call.1} parent=5 // pred_region
        // Predicated region
        $region25: #{tpu_custom_call.1} parent=23 // pred_check
          %p221 = pneg %p56
        $region26: #{tpu_custom_call.1} parent=23 // pred_check_branch
          %223 = sbr.rel (%p221) target = $region28
        $region27: #{tpu_custom_call.1} parent=23 // pred_region
          %s224 = smul.u32 %s22, 4
          %s225 = ssub.s32 %s224, 1
          %p226 = scmp.gt.s32.totalorder %s225, 0
          %s227 = scalar_select %p226, %s225, 0
          %p228 = scmp.lt.s32.totalorder %s21, 0
          %s229 = scalar_select %p228, %s21, 0
          %p230 = scmp.lt.s32.totalorder %s227, 11
          %s231 = scalar_select %p230, %s227, 11
          %s232 = smul.addr %s231, 4
          %s233 = smul.addr %s229, 48
          %s234 = sadd.s32 %s232, %s233
          %s235 = smul.addr %s234, 4
          %s236 = scalar_lea.vmem %s0, %s235
          %s237 = smul.u32 %s22, 4
          %s238 = ssub.s32 %s237, 1
          %p239 = scmp.gt.s32.totalorder %s238, 0
          %s240 = scalar_select %p239, %s238, 0
        $region28: #{tpu_custom_call.1} parent=23 // pred_fallthru
          _
        // Predicated region
        $region29: #{tpu_custom_call.1} parent=23 // pred_check
          %p241 = pneg %p84
        $region30: #{tpu_custom_call.1} parent=23 // pred_check_branch
          %243 = sbr.rel (%p241) target = $region32
        $region31: #{tpu_custom_call.1} parent=23 // pred_region
          %s244 = smul.u32 4, %s22
          %p245 = scmp.lt.s32.totalorder %s21, 0
          %s246 = scalar_select %p245, %s21, 0
          %p247 = scmp.lt.s32.totalorder %s244, 11
          %s248 = scalar_select %p247, %s244, 11
          %s249 = smul.addr %s248, 4
          %s250 = smul.addr %s246, 48
          %s251 = sadd.s32 %s249, %s250
          %s252 = smul.addr %s251, 4
          %s253 = scalar_lea.vmem %s1, %s252
          %s254 = smul.u32 4, %s22
        $region32: #{tpu_custom_call.1} parent=23 // pred_fallthru
          _
        // Predicated region
        $region33: #{tpu_custom_call.1} parent=23 // pred_check
          %p255 = pneg %p120
        $region34: #{tpu_custom_call.1} parent=23 // pred_check_branch
          %257 = sbr.rel (%p255) target = $region36
        $region35: #{tpu_custom_call.1} parent=23 // pred_region
          %s258 = sadd.s32 %s22, 1
          %s259 = smul.u32 %s258, 4
          %p260 = scmp.lt.s32.totalorder %s259, 11
          %s261 = scalar_select %p260, %s259, 11
          %p262 = scmp.lt.s32.totalorder %s21, 0
          %s263 = scalar_select %p262, %s21, 0
          %p264 = scmp.lt.s32.totalorder %s261, 11
          %s265 = scalar_select %p264, %s261, 11
          %s266 = smul.addr %s265, 4
          %s267 = smul.addr %s263, 48
          %s268 = sadd.s32 %s266, %s267
          %s269 = smul.addr %s268, 4
          %s270 = scalar_lea.vmem %s2, %s269
          %s271 = sadd.s32 %s22, 1
          %s272 = smul.u32 %s271, 4
          %p273 = scmp.lt.s32.totalorder %s272, 11
          %s274 = scalar_select %p273, %s272, 11
        $region36: #{tpu_custom_call.1} parent=23 // pred_fallthru
          _
      $region24: #{tpu_custom_call.1} parent=5 // pred_fallthru
        _
      %p275 = scmp.le.s32.totalorder 1, %s14
      %p276 = scmp.lt.s32.totalorder %s14, 4
      %p277 = pnand %p275, %p276
      %p278 = pneg %p277
      // Predicated region
      $region37: #{tpu_custom_call.1} parent=5 // pred_check
        _
      $region38: #{tpu_custom_call.1} parent=5 // pred_check_branch
        %280 = sbr.rel (%p277) target = $region40
      $region39: #{tpu_custom_call.1} parent=5 // pred_region
        %s281 = ssub.s32 %s14, 1
        %s282 = smul.u32 %s24, 4
        %s283 = ssub.s32 %s282, 1
        %p284 = scmp.gt.s32.totalorder %s283, 0
        %s285 = scalar_select %p284, %s283, 0
        %p286 = scmp.lt.s32.totalorder %s23, 0
        %s287 = scalar_select %p286, %s23, 0
        %p288 = scmp.lt.s32.totalorder %s285, 11
        %s289 = scalar_select %p288, %s285, 11
        %s290 = smul.addr %s289, 4
        %s291 = smul.addr %s287, 48
        %s292 = sadd.s32 %s290, %s291
        %s293 = smul.addr %s292, 4
        %s294 = scalar_lea.vmem %s0, %s293
        %p295 = pneg %p62
        %p296 = pneg %p59
        %s297 = smul.u32 4, %s24
        %p298 = scmp.lt.s32.totalorder %s23, 0
        %s299 = scalar_select %p298, %s23, 0
        %p300 = scmp.lt.s32.totalorder %s297, 11
        %s301 = scalar_select %p300, %s297, 11
        %s302 = smul.addr %s301, 4
        %s303 = smul.addr %s299, 48
        %s304 = sadd.s32 %s302, %s303
        %s305 = smul.addr %s304, 4
        %s306 = scalar_lea.vmem %s1, %s305
        %p307 = pneg %p90
        %p308 = pneg %p87
        %s309 = sadd.s32 %s24, 1
        %s310 = smul.u32 %s309, 4
        %p311 = scmp.lt.s32.totalorder %s310, 11
        %s312 = scalar_select %p311, %s310, 11
        %p313 = scmp.lt.s32.totalorder %s23, 0
        %s314 = scalar_select %p313, %s23, 0
        %p315 = scmp.lt.s32.totalorder %s312, 11
        %s316 = scalar_select %p315, %s312, 11
        %s317 = smul.addr %s316, 4
        %s318 = smul.addr %s314, 48
        %s319 = sadd.s32 %s317, %s318
        %s320 = smul.addr %s319, 4
        %s321 = scalar_lea.vmem %s2, %s320
        %p322 = pneg %p126
        %p323 = pneg %p123
        %p324 = pneg %p147
        %p325 = pneg %p144
        %p326 = pneg %p168
        %p327 = pneg %p165
        %p328 = pneg %p196
        %p329 = pneg %p193
        %s330 = sand.u32 %s183, 1
        %s331 = scalar_lea.sflag [#allocation6], %s330
        %s332 = sand.u32 %s183, 1
        %s333 = smul.addr %s332, 64
        %s334 = scalar_lea.vmem [#allocation5], %s333
        %s335 = smul.u32 %s24, 4
        %s336 = ssub.s32 %s335, 1
        %p337 = scmp.gt.s32.totalorder %s336, 0
        %s338 = scalar_select %p337, %s336, 0
        %p339 = scmp.lt.s32.totalorder %s23, 0
        %s340 = scalar_select %p339, %s23, 0
        %p341 = scmp.lt.s32.totalorder %s338, 11
        %s342 = scalar_select %p341, %s338, 11
        %s343 = smul.addr %s342, 4
        %s344 = smul.addr %s340, 48
        %s345 = sadd.s32 %s343, %s344
        %s346 = smul.addr %s345, 4
        %s347 = scalar_lea.vmem %s0, %s346
        %s348 = smul.u32 %s24, 4
        %s349 = ssub.s32 %s348, 1
        %p350 = scmp.gt.s32.totalorder %s349, 0
        %s351 = scalar_select %p350, %s349, 0
        %s352 = smul.u32 4, %s24
        %p353 = scmp.lt.s32.totalorder %s23, 0
        %s354 = scalar_select %p353, %s23, 0
        %p355 = scmp.lt.s32.totalorder %s352, 11
        %s356 = scalar_select %p355, %s352, 11
        %s357 = smul.addr %s356, 4
        %s358 = smul.addr %s354, 48
        %s359 = sadd.s32 %s357, %s358
        %s360 = smul.addr %s359, 4
        %s361 = scalar_lea.vmem %s1, %s360
        %s362 = smul.u32 4, %s24
        %s363 = sadd.s32 %s24, 1
        %s364 = smul.u32 %s363, 4
        %p365 = scmp.lt.s32.totalorder %s364, 11
        %s366 = scalar_select %p365, %s364, 11
        %p367 = scmp.lt.s32.totalorder %s23, 0
        %s368 = scalar_select %p367, %s23, 0
        %p369 = scmp.lt.s32.totalorder %s366, 11
        %s370 = scalar_select %p369, %s366, 11
        %s371 = smul.addr %s370, 4
        %s372 = smul.addr %s368, 48
        %s373 = sadd.s32 %s371, %s372
        %s374 = smul.addr %s373, 4
        %s375 = scalar_lea.vmem %s2, %s374
        %s376 = sadd.s32 %s24, 1
        %s377 = smul.u32 %s376, 4
        %p378 = scmp.lt.s32.totalorder %s377, 11
        %s379 = scalar_select %p378, %s377, 11
        %s380 = smul.u32 4, %s24
        %v384 = vld [vmem:[%s347] sm:$0xf]
        %v385 = vld [vmem:[%s347 + $0x4] sm:$0xf]
        %v386 = vld [vmem:[%s347 + $0x8] sm:$0xf]
        %v387 = vld [vmem:[%s347 + $0xc] sm:$0xf]
        %p388 = scmp.gt.s32.totalorder %s24, 0
        %s389 = scalar_select %p388, 1, 0
        %s390 = scvt.s32.f32 %s389
        %p392 = scmp.ne.f32.partialorder %s390, %s390
        %s393 = sshrl.u32 %s390, 16
        %s394 = sand.u32 %s393, 1
        %s395 = sadd.s32 32767, %s394
        %s396 = sadd.s32 %s390, %s395
        %s397 = sand.u32 %s396, 4294901760
        %s398 = scalar_select %p392, 2143289344, %s397
        %s400 = sshrl.u32 %s398, 16
        %s401 = sshll.u32 %s400, 16
        %s402 = sor.u32 %s400, %s401
        %v403 = vstv %s402
        %v405 = vmul.bf16 %v384, %v403
        %v406 = vmul.bf16 %v385, %v403
        %v407 = vmul.bf16 %v386, %v403
        %v408 = vmul.bf16 %v387, %v403
        %v409 = vld [vmem:[%s375] sm:$0xf]
        %v410 = vld [vmem:[%s375 + $0x4] sm:$0xf]
        %v411 = vld [vmem:[%s375 + $0x8] sm:$0xf]
        %v412 = vld [vmem:[%s375 + $0xc] sm:$0xf]
        %p413 = scmp.lt.s32.totalorder %s24, 2
        %s414 = scalar_select %p413, 1, 0
        %s415 = scvt.s32.f32 %s414
        %p417 = scmp.ne.f32.partialorder %s415, %s415
        %s418 = sshrl.u32 %s415, 16
        %s419 = sand.u32 %s418, 1
        %s420 = sadd.s32 32767, %s419
        %s421 = sadd.s32 %s415, %s420
        %s422 = sand.u32 %s421, 4294901760
        %s423 = scalar_select %p417, 2143289344, %s422
        %s425 = sshrl.u32 %s423, 16
        %s426 = sshll.u32 %s425, 16
        %s427 = sor.u32 %s425, %s426
        %v428 = vstv %s427
        %v430 = vmul.bf16 %v409, %v428
        %v431 = vmul.bf16 %v410, %v428
        %v432 = vmul.bf16 %v411, %v428
        %v433 = vmul.bf16 %v412, %v428
        %vm434 = vcmask 64512
        %435 = vst.msk [vmem:[#allocation2] sm:$0xff] %vm434, 0
        %436 = vst.msk [vmem:[#allocation2 + $0x8] sm:$0xff] %vm434, 0
        %v441 = vunpack.c.l.b16 %v405
        %v442 = vunpack.c.l.b16 %v406
        %v443 = vunpack.c.l.b16 %v407
        %v444 = vunpack.c.l.b16 %v408
        %v445 = vpack.c.b16 %v442, %v441
        %v446 = vpack.c.b16 %v444, %v443
        %449 = vst.msk [vmem:[#allocation2 + $0x10] sm:$0xff] %vm434, %v445
        %450 = vst.msk [vmem:[#allocation2 + $0x18] sm:$0xff] %vm434, %v446
        %v451 = vld [vmem:[%s361] sm:$0xf]
        %v452 = vld [vmem:[%s361 + $0x4] sm:$0xf]
        %v453 = vld [vmem:[%s361 + $0x8] sm:$0xf]
        %v454 = vld [vmem:[%s361 + $0xc] sm:$0xf]
        %v455 = vld [vmem:[%s361 + $0x10] sm:$0xf]
        %v456 = vld [vmem:[%s361 + $0x14] sm:$0xf]
        %v457 = vld [vmem:[%s361 + $0x18] sm:$0xf]
        %v458 = vld [vmem:[%s361 + $0x1c] sm:$0xf]
        %v459 = vld [vmem:[%s361 + $0x20] sm:$0xf]
        %v460 = vld [vmem:[%s361 + $0x24] sm:$0xf]
        %v461 = vld [vmem:[%s361 + $0x28] sm:$0xf]
        %v462 = vld [vmem:[%s361 + $0x2c] sm:$0xf]
        %v463 = vld [vmem:[%s361 + $0x30] sm:$0xf]
        %v464 = vld [vmem:[%s361 + $0x34] sm:$0xf]
        %v465 = vld [vmem:[%s361 + $0x38] sm:$0xf]
        %v466 = vld [vmem:[%s361 + $0x3c] sm:$0xf]
        %v483 = vunpack.c.l.b16 %v451
        %v484 = vunpack.c.l.b16 %v452
        %v485 = vunpack.c.l.b16 %v453
        %v486 = vunpack.c.l.b16 %v454
        %v487 = vunpack.c.l.b16 %v455
        %v488 = vunpack.c.l.b16 %v456
        %v489 = vunpack.c.l.b16 %v457
        %v490 = vunpack.c.l.b16 %v458
        %v491 = vunpack.c.l.b16 %v459
        %v492 = vunpack.c.l.b16 %v460
        %v493 = vunpack.c.l.b16 %v461
        %v494 = vunpack.c.l.b16 %v462
        %v495 = vunpack.c.l.b16 %v463
        %v496 = vunpack.c.l.b16 %v464
        %v497 = vunpack.c.l.b16 %v465
        %v498 = vunpack.c.l.b16 %v466
        %v499 = vpack.c.b16 %v484, %v483
        %v500 = vpack.c.b16 %v486, %v485
        %v501 = vpack.c.b16 %v488, %v487
        %v502 = vpack.c.b16 %v490, %v489
        %v503 = vpack.c.b16 %v492, %v491
        %v504 = vpack.c.b16 %v494, %v493
        %v505 = vpack.c.b16 %v496, %v495
        %v506 = vpack.c.b16 %v498, %v497
        %515 = vst.msk [vmem:[#allocation2 + $0x20] sm:$0xff] %vm434, %v499
        %516 = vst.msk [vmem:[#allocation2 + $0x28] sm:$0xff] %vm434, %v500
        %517 = vst.msk [vmem:[#allocation2 + $0x30] sm:$0xff] %vm434, %v501
        %518 = vst.msk [vmem:[#allocation2 + $0x38] sm:$0xff] %vm434, %v502
        %519 = vst.msk [vmem:[#allocation2 + $0x40] sm:$0xff] %vm434, %v503
        %520 = vst.msk [vmem:[#allocation2 + $0x48] sm:$0xff] %vm434, %v504
        %521 = vst.msk [vmem:[#allocation2 + $0x50] sm:$0xff] %vm434, %v505
        %522 = vst.msk [vmem:[#allocation2 + $0x58] sm:$0xff] %vm434, %v506
        %v527 = vunpack.c.l.b16 %v430
        %v528 = vunpack.c.l.b16 %v431
        %v529 = vunpack.c.l.b16 %v432
        %v530 = vunpack.c.l.b16 %v433
        %v531 = vpack.c.b16 %v528, %v527
        %v532 = vpack.c.b16 %v530, %v529
        %535 = vst.msk [vmem:[#allocation2 + $0x60] sm:$0xff] %vm434, %v531
        %536 = vst.msk [vmem:[#allocation2 + $0x68] sm:$0xff] %vm434, %v532
        %537 = vst.msk [vmem:[#allocation2 + $0x70] sm:$0xff] %vm434, 0
        %538 = vst.msk [vmem:[#allocation2 + $0x78] sm:$0xff] %vm434, 0
        %v539 = vld [vmem:[#allocation2 + $0x8] sm:$0x80]
        %v540 = vld [vmem:[#allocation2 + $0x10] sm:$0xff]
        %v541 = vld [vmem:[#allocation2 + $0x18] sm:$0xff]
        %v542 = vld [vmem:[#allocation2 + $0x20] sm:$0xff]
        %v543 = vld [vmem:[#allocation2 + $0x28] sm:$0xff]
        %v544 = vld [vmem:[#allocation2 + $0x30] sm:$0xff]
        %v545 = vld [vmem:[#allocation2 + $0x38] sm:$0xff]
        %v546 = vld [vmem:[#allocation2 + $0x40] sm:$0xff]
        %v547 = vld [vmem:[#allocation2 + $0x48] sm:$0xff]
        %v548 = vld [vmem:[#allocation2 + $0x50] sm:$0xff]
        %v549 = vld [vmem:[#allocation2 + $0x58] sm:$0xff]
        %v550 = vld [vmem:[#allocation2 + $0x60] sm:$0xff]
        %v551 = vld [vmem:[#allocation2 + $0x68] sm:$0xff]
        %vm552 = vsmask.f32 256
        %v554 = vshrl.u32 %v539, 16
        %v556 = vrot.slane %v554, 7
        %v558 = vshrl.u32 %v540, 16
        %v560 = vrot.slane %v558, 7
        %v561 = vshll.u32 %v540, 16
        %v563 = vor.u32 %v560, %v561
        %v564 = vsel %vm552, %v556, %v563
        %v566 = vshrl.u32 %v541, 16
        %v568 = vrot.slane %v566, 7
        %v569 = vshll.u32 %v541, 16
        %v571 = vor.u32 %v568, %v569
        %v572 = vsel %vm552, %v560, %v571
        %v574 = vshrl.u32 %v542, 16
        %v576 = vrot.slane %v574, 7
        %v577 = vshll.u32 %v542, 16
        %v579 = vor.u32 %v576, %v577
        %v580 = vsel %vm552, %v568, %v579
        %v582 = vshrl.u32 %v543, 16
        %v584 = vrot.slane %v582, 7
        %v585 = vshll.u32 %v543, 16
        %v587 = vor.u32 %v584, %v585
        %v588 = vsel %vm552, %v576, %v587
        %v590 = vshrl.u32 %v544, 16
        %v592 = vrot.slane %v590, 7
        %v593 = vshll.u32 %v544, 16
        %v595 = vor.u32 %v592, %v593
        %v596 = vsel %vm552, %v584, %v595
        %v598 = vshrl.u32 %v545, 16
        %v600 = vrot.slane %v598, 7
        %v601 = vshll.u32 %v545, 16
        %v603 = vor.u32 %v600, %v601
        %v604 = vsel %vm552, %v592, %v603
        %v606 = vshrl.u32 %v546, 16
        %v608 = vrot.slane %v606, 7
        %v609 = vshll.u32 %v546, 16
        %v611 = vor.u32 %v608, %v609
        %v612 = vsel %vm552, %v600, %v611
        %v614 = vshrl.u32 %v547, 16
        %v616 = vrot.slane %v614, 7
        %v617 = vshll.u32 %v547, 16
        %v619 = vor.u32 %v616, %v617
        %v620 = vsel %vm552, %v608, %v619
        %v622 = vshrl.u32 %v548, 16
        %v624 = vrot.slane %v622, 7
        %v625 = vshll.u32 %v548, 16
        %v627 = vor.u32 %v624, %v625
        %v628 = vsel %vm552, %v616, %v627
        %v630 = vshrl.u32 %v549, 16
        %v632 = vrot.slane %v630, 7
        %v633 = vshll.u32 %v549, 16
        %v635 = vor.u32 %v632, %v633
        %v636 = vsel %vm552, %v624, %v635
        %v638 = vshrl.u32 %v550, 16
        %v640 = vrot.slane %v638, 7
        %v641 = vshll.u32 %v550, 16
        %v643 = vor.u32 %v640, %v641
        %v644 = vsel %vm552, %v632, %v643
        %v646 = vshrl.u32 %v551, 16
        %v648 = vrot.slane %v646, 7
        %v649 = vshll.u32 %v551, 16
        %v651 = vor.u32 %v648, %v649
        %v652 = vsel %vm552, %v640, %v651
        %665 = vst.msk [vmem:[#allocation3] sm:$0xff] %vm434, %v564
        %666 = vst.msk [vmem:[#allocation3 + $0x8] sm:$0xff] %vm434, %v572
        %667 = vst.msk [vmem:[#allocation3 + $0x10] sm:$0xff] %vm434, %v580
        %668 = vst.msk [vmem:[#allocation3 + $0x18] sm:$0xff] %vm434, %v588
        %669 = vst.msk [vmem:[#allocation3 + $0x20] sm:$0xff] %vm434, %v596
        %670 = vst.msk [vmem:[#allocation3 + $0x28] sm:$0xff] %vm434, %v604
        %671 = vst.msk [vmem:[#allocation3 + $0x30] sm:$0xff] %vm434, %v612
        %672 = vst.msk [vmem:[#allocation3 + $0x38] sm:$0xff] %vm434, %v620
        %673 = vst.msk [vmem:[#allocation3 + $0x40] sm:$0xff] %vm434, %v628
        %674 = vst.msk [vmem:[#allocation3 + $0x48] sm:$0xff] %vm434, %v636
        %675 = vst.msk [vmem:[#allocation3 + $0x50] sm:$0xff] %vm434, %v644
        %676 = vst.msk [vmem:[#allocation3 + $0x58] sm:$0xff] %vm434, %v652
        %v677 = vld [vmem:[#allocation2 + $0x10] sm:$0xff]
        %v678 = vld [vmem:[#allocation2 + $0x18] sm:$0xff]
        %v679 = vld [vmem:[#allocation2 + $0x20] sm:$0xff]
        %v680 = vld [vmem:[#allocation2 + $0x28] sm:$0xff]
        %v681 = vld [vmem:[#allocation2 + $0x30] sm:$0xff]
        %v682 = vld [vmem:[#allocation2 + $0x38] sm:$0xff]
        %v683 = vld [vmem:[#allocation2 + $0x40] sm:$0xff]
        %v684 = vld [vmem:[#allocation2 + $0x48] sm:$0xff]
        %v685 = vld [vmem:[#allocation2 + $0x50] sm:$0xff]
        %v686 = vld [vmem:[#allocation2 + $0x58] sm:$0xff]
        %v687 = vld [vmem:[#allocation2 + $0x60] sm:$0xff]
        %v688 = vld [vmem:[#allocation2 + $0x68] sm:$0xff]
        %701 = vrot.lane.b32.xlu0 %v677, 8
        %v702 = vpop.permute.xlu0 %701
        %703 = vrot.lane.b32.xlu0 %v678, 8
        %v704 = vpop.permute.xlu0 %703
        %705 = vrot.lane.b32.xlu0 %v679, 8
        %v706 = vpop.permute.xlu0 %705
        %707 = vrot.lane.b32.xlu0 %v680, 8
        %v708 = vpop.permute.xlu0 %707
        %709 = vrot.lane.b32.xlu0 %v681, 8
        %v710 = vpop.permute.xlu0 %709
        %711 = vrot.lane.b32.xlu0 %v682, 8
        %v712 = vpop.permute.xlu0 %711
        %713 = vrot.lane.b32.xlu0 %v683, 8
        %v714 = vpop.permute.xlu0 %713
        %715 = vrot.lane.b32.xlu0 %v684, 8
        %v716 = vpop.permute.xlu0 %715
        %717 = vrot.lane.b32.xlu0 %v685, 8
        %v718 = vpop.permute.xlu0 %717
        %719 = vrot.lane.b32.xlu0 %v686, 8
        %v720 = vpop.permute.xlu0 %719
        %721 = vrot.lane.b32.xlu0 %v687, 8
        %v722 = vpop.permute.xlu0 %721
        %723 = vrot.lane.b32.xlu0 %v688, 8
        %v724 = vpop.permute.xlu0 %723
        %vm737 = vcmask 130112
        %738 = vst.msk [vmem:[#allocation3] sm:$0xff] %vm737, %v702
        %739 = vst.msk [vmem:[#allocation3 + $0x8] sm:$0xff] %vm737, %v704
        %740 = vst.msk [vmem:[#allocation3 + $0x10] sm:$0xff] %vm737, %v706
        %741 = vst.msk [vmem:[#allocation3 + $0x18] sm:$0xff] %vm737, %v708
        %742 = vst.msk [vmem:[#allocation3 + $0x20] sm:$0xff] %vm737, %v710
        %743 = vst.msk [vmem:[#allocation3 + $0x28] sm:$0xff] %vm737, %v712
        %744 = vst.msk [vmem:[#allocation3 + $0x30] sm:$0xff] %vm737, %v714
        %745 = vst.msk [vmem:[#allocation3 + $0x38] sm:$0xff] %vm737, %v716
        %746 = vst.msk [vmem:[#allocation3 + $0x40] sm:$0xff] %vm737, %v718
        %747 = vst.msk [vmem:[#allocation3 + $0x48] sm:$0xff] %vm737, %v720
        %748 = vst.msk [vmem:[#allocation3 + $0x50] sm:$0xff] %vm737, %v722
        %749 = vst.msk [vmem:[#allocation3 + $0x58] sm:$0xff] %vm737, %v724
        %v750 = vld [vmem:[#allocation2 + $0x10] sm:$0xff]
        %v751 = vld [vmem:[#allocation2 + $0x18] sm:$0xff]
        %v752 = vld [vmem:[#allocation2 + $0x20] sm:$0xff]
        %v753 = vld [vmem:[#allocation2 + $0x28] sm:$0xff]
        %v754 = vld [vmem:[#allocation2 + $0x30] sm:$0xff]
        %v755 = vld [vmem:[#allocation2 + $0x38] sm:$0xff]
        %v756 = vld [vmem:[#allocation2 + $0x40] sm:$0xff]
        %v757 = vld [vmem:[#allocation2 + $0x48] sm:$0xff]
        %v758 = vld [vmem:[#allocation2 + $0x50] sm:$0xff]
        %v759 = vld [vmem:[#allocation2 + $0x58] sm:$0xff]
        %v760 = vld [vmem:[#allocation2 + $0x60] sm:$0xff]
        %v761 = vld [vmem:[#allocation2 + $0x68] sm:$0xff]
        %v762 = vld [vmem:[#allocation2 + $0x70] sm:$0x1]
        %vm763 = vsmask.f32 7424
        %v765 = vshrl.u32 %v750, 16
        %v767 = vshll.u32 %v750, 16
        %v769 = vrot.slane %v767, 1
        %v770 = vor.u32 %v765, %v769
        %v772 = vshll.u32 %v751, 16
        %v774 = vrot.slane %v772, 1
        %v775 = vsel %vm763, %v770, %v774
        %v776 = vshrl.u32 %v751, 16
        %v778 = vor.u32 %v776, %v774
        %v780 = vshll.u32 %v752, 16
        %v782 = vrot.slane %v780, 1
        %v783 = vsel %vm763, %v778, %v782
        %v784 = vshrl.u32 %v752, 16
        %v786 = vor.u32 %v784, %v782
        %v788 = vshll.u32 %v753, 16
        %v790 = vrot.slane %v788, 1
        %v791 = vsel %vm763, %v786, %v790
        %v792 = vshrl.u32 %v753, 16
        %v794 = vor.u32 %v792, %v790
        %v796 = vshll.u32 %v754, 16
        %v798 = vrot.slane %v796, 1
        %v799 = vsel %vm763, %v794, %v798
        %v800 = vshrl.u32 %v754, 16
        %v802 = vor.u32 %v800, %v798
        %v804 = vshll.u32 %v755, 16
        %v806 = vrot.slane %v804, 1
        %v807 = vsel %vm763, %v802, %v806
        %v808 = vshrl.u32 %v755, 16
        %v810 = vor.u32 %v808, %v806
        %v812 = vshll.u32 %v756, 16
        %v814 = vrot.slane %v812, 1
        %v815 = vsel %vm763, %v810, %v814
        %v816 = vshrl.u32 %v756, 16
        %v818 = vor.u32 %v816, %v814
        %v820 = vshll.u32 %v757, 16
        %v822 = vrot.slane %v820, 1
        %v823 = vsel %vm763, %v818, %v822
        %v824 = vshrl.u32 %v757, 16
        %v826 = vor.u32 %v824, %v822
        %v828 = vshll.u32 %v758, 16
        %v830 = vrot.slane %v828, 1
        %v831 = vsel %vm763, %v826, %v830
        %v832 = vshrl.u32 %v758, 16
        %v834 = vor.u32 %v832, %v830
        %v836 = vshll.u32 %v759, 16
        %v838 = vrot.slane %v836, 1
        %v839 = vsel %vm763, %v834, %v838
        %v840 = vshrl.u32 %v759, 16
        %v842 = vor.u32 %v840, %v838
        %v844 = vshll.u32 %v760, 16
        %v846 = vrot.slane %v844, 1
        %v847 = vsel %vm763, %v842, %v846
        %v848 = vshrl.u32 %v760, 16
        %v850 = vor.u32 %v848, %v846
        %v852 = vshll.u32 %v761, 16
        %v854 = vrot.slane %v852, 1
        %v855 = vsel %vm763, %v850, %v854
        %v856 = vshrl.u32 %v761, 16
        %v858 = vor.u32 %v856, %v854
        %v860 = vshll.u32 %v762, 16
        %v862 = vrot.slane %v860, 1
        %v863 = vsel %vm763, %v858, %v862
        %864 = vrot.lane.b32.xlu0 %v775, 16
        %v865 = vpop.permute.xlu0 %864
        %866 = vrot.lane.b32.xlu0 %v783, 16
        %v867 = vpop.permute.xlu0 %866
        %868 = vrot.lane.b32.xlu0 %v791, 16
        %v869 = vpop.permute.xlu0 %868
        %870 = vrot.lane.b32.xlu0 %v799, 16
        %v871 = vpop.permute.xlu0 %870
        %872 = vrot.lane.b32.xlu0 %v807, 16
        %v873 = vpop.permute.xlu0 %872
        %874 = vrot.lane.b32.xlu0 %v815, 16
        %v875 = vpop.permute.xlu0 %874
        %876 = vrot.lane.b32.xlu0 %v823, 16
        %v877 = vpop.permute.xlu0 %876
        %878 = vrot.lane.b32.xlu0 %v831, 16
        %v879 = vpop.permute.xlu0 %878
        %880 = vrot.lane.b32.xlu0 %v839, 16
        %v881 = vpop.permute.xlu0 %880
        %882 = vrot.lane.b32.xlu0 %v847, 16
        %v883 = vpop.permute.xlu0 %882
        %884 = vrot.lane.b32.xlu0 %v855, 16
        %v885 = vpop.permute.xlu0 %884
        %886 = vrot.lane.b32.xlu0 %v863, 16
        %v887 = vpop.permute.xlu0 %886
        %vm900 = vcmask 195712
        %901 = vst.msk [vmem:[#allocation3] sm:$0xff] %vm900, %v865
        %902 = vst.msk [vmem:[#allocation3 + $0x8] sm:$0xff] %vm900, %v867
        %903 = vst.msk [vmem:[#allocation3 + $0x10] sm:$0xff] %vm900, %v869
        %904 = vst.msk [vmem:[#allocation3 + $0x18] sm:$0xff] %vm900, %v871
        %905 = vst.msk [vmem:[#allocation3 + $0x20] sm:$0xff] %vm900, %v873
        %906 = vst.msk [vmem:[#allocation3 + $0x28] sm:$0xff] %vm900, %v875
        %907 = vst.msk [vmem:[#allocation3 + $0x30] sm:$0xff] %vm900, %v877
        %908 = vst.msk [vmem:[#allocation3 + $0x38] sm:$0xff] %vm900, %v879
        %909 = vst.msk [vmem:[#allocation3 + $0x40] sm:$0xff] %vm900, %v881
        %910 = vst.msk [vmem:[#allocation3 + $0x48] sm:$0xff] %vm900, %v883
        %911 = vst.msk [vmem:[#allocation3 + $0x50] sm:$0xff] %vm900, %v885
        %912 = vst.msk [vmem:[#allocation3 + $0x58] sm:$0xff] %vm900, %v887
        %v913 = vld [vmem:[#allocation3] sm:$0xff]
        %v914 = vld [vmem:[#allocation3 + $0x8] sm:$0xff]
        %v915 = vld [vmem:[#allocation3 + $0x10] sm:$0xff]
        %v916 = vld [vmem:[#allocation3 + $0x18] sm:$0xff]
        %v917 = vld [vmem:[#allocation3 + $0x20] sm:$0xff]
        %v918 = vld [vmem:[#allocation3 + $0x28] sm:$0xff]
        %v919 = vld [vmem:[#allocation3 + $0x30] sm:$0xff]
        %v920 = vld [vmem:[#allocation3 + $0x38] sm:$0xff]
        %v921 = vld [vmem:[%s3] sm:$0xf]
        %v922 = vld [vmem:[%s3 + $0x4] sm:$0xf]
        %v923 = vld [vmem:[%s3 + $0x8] sm:$0xf]
        %v927 = vunpack.c.l.b16 %v921
        %v928 = vunpack.c.l.b16 %v922
        %v929 = vunpack.c.l.b16 %v923
        %v930 = vpack.c.b16 %v928, %v927
        %v931 = vpack.c.b16 %v929, %v929
        %vm933 = vcmask 195584
        %v935 = vsel %vm933, %v913, 0
        %v938 = vsel %vm933, %v914, 0
        %v941 = vsel %vm933, %v915, 0
        %v944 = vsel %vm933, %v916, 0
        %v947 = vsel %vm933, %v917, 0
        %v950 = vsel %vm933, %v918, 0
        %v953 = vsel %vm933, %v919, 0
        %v956 = vsel %vm933, %v920, 0
        %vm958 = vcmask 1043456
        %v960 = vsel %vm958, %v931, 0
        %962 = vmatprep.subr.bf16.mxu0 0
        %963 = vmatpush1.bf16.msra.mxu0 %v930
        %964 = vmatprep.subr.bf16.mxu0 0
        %965 = vmatpush1.bf16.msra.mxu0 %v960
        %966 = vmatprep.subr.bf16.mxu0 0
        %967 = vmatpush1.bf16.msra.mxu0 0
        %968 = vmatprep.subr.bf16.mxu0 0
        %969 = vmatpush1.bf16.msra.mxu0 0
        %970 = vmatprep.subr.bf16.mxu0 0
        %971 = vmatpush1.bf16.msra.mxu0 0
        %972 = vmatprep.subr.bf16.mxu0 0
        %973 = vmatpush1.bf16.msra.mxu0 0
        %974 = vmatprep.subr.bf16.mxu0 0
        %975 = vmatpush1.bf16.msra.mxu0 0
        %976 = vmatprep.subr.bf16.mxu0 0
        %977 = vmatpush1.bf16.msra.mxu0 0
        %978 = vmatprep.subr.bf16.mxu0 0
        %979 = vmatpush1.bf16.msra.mxu0 0
        %980 = vmatprep.subr.bf16.mxu0 0
        %981 = vmatpush1.bf16.msra.mxu0 0
        %982 = vmatprep.subr.bf16.mxu0 0
        %983 = vmatpush1.bf16.msra.mxu0 0
        %984 = vmatprep.subr.bf16.mxu0 0
        %985 = vmatpush1.bf16.msra.mxu0 0
        %986 = vmatprep.subr.bf16.mxu0 0
        %987 = vmatpush1.bf16.msra.mxu0 0
        %988 = vmatprep.subr.bf16.mxu0 0
        %989 = vmatpush1.bf16.msra.mxu0 0
        %990 = vmatprep.subr.bf16.mxu0 0
        %991 = vmatpush1.bf16.msra.mxu0 0
        %992 = vmatprep.subr.bf16.mxu0 0
        %993 = vmatpush1.bf16.msra.mxu0 0
        %994 = vmatprep.mubr.bf16.mxu0 0
        %995 = vmatmul.mubr.bf16.gmra.mrb[0].mxu0 %v935
        %v996 = vpop.f32.mrb[0].mxu0
        %v997 = vadd.f32 0.0, %v996
        %v998 = vpop.f32.mrb[0].mxu0
        %v999 = vpop.f32.mrb[0].mxu0
        %v1000 = vadd.f32 0.0, %v999
        %v1001 = vpop.f32.mrb[0].mxu0
        %1002 = vmatprep.mubr.bf16.mxu0 0
        %1003 = vmatmul.mubr.bf16.gmra.mrb[0].mxu0 %v938
        %v1004 = vpop.f32.mrb[0].mxu0
        %v1005 = vadd.f32 0.0, %v1004
        %v1006 = vpop.f32.mrb[0].mxu0
        %v1007 = vpop.f32.mrb[0].mxu0
        %v1008 = vadd.f32 0.0, %v1007
        %v1009 = vpop.f32.mrb[0].mxu0
        %1010 = vmatprep.mubr.bf16.mxu0 0
        %1011 = vmatmul.mubr.bf16.gmra.mrb[0].mxu0 %v941
        %v1012 = vpop.f32.mrb[0].mxu0
        %v1013 = vadd.f32 0.0, %v1012
        %v1014 = vpop.f32.mrb[0].mxu0
        %v1015 = vpop.f32.mrb[0].mxu0
        %v1016 = vadd.f32 0.0, %v1015
        %v1017 = vpop.f32.mrb[0].mxu0
        %1018 = vmatprep.mubr.bf16.mxu0 0
        %1019 = vmatmul.mubr.bf16.gmra.mrb[0].mxu0 %v944
        %v1020 = vpop.f32.mrb[0].mxu0
        %v1021 = vadd.f32 0.0, %v1020
        %v1022 = vpop.f32.mrb[0].mxu0
        %v1023 = vpop.f32.mrb[0].mxu0
        %v1024 = vadd.f32 0.0, %v1023
        %v1025 = vpop.f32.mrb[0].mxu0
        %1026 = vmatprep.mubr.bf16.mxu0 0
        %1027 = vmatmul.mubr.bf16.gmra.mrb[0].mxu0 %v947
        %v1028 = vpop.f32.mrb[0].mxu0
        %v1029 = vadd.f32 0.0, %v1028
        %v1030 = vpop.f32.mrb[0].mxu0
        %v1031 = vpop.f32.mrb[0].mxu0
        %v1032 = vadd.f32 0.0, %v1031
        %v1033 = vpop.f32.mrb[0].mxu0
        %1034 = vmatprep.mubr.bf16.mxu0 0
        %1035 = vmatmul.mubr.bf16.gmra.mrb[0].mxu0 %v950
        %v1036 = vpop.f32.mrb[0].mxu0
        %v1037 = vadd.f32 0.0, %v1036
        %v1038 = vpop.f32.mrb[0].mxu0
        %v1039 = vpop.f32.mrb[0].mxu0
        %v1040 = vadd.f32 0.0, %v1039
        %v1041 = vpop.f32.mrb[0].mxu0
        %1042 = vmatprep.mubr.bf16.mxu0 0
        %1043 = vmatmul.mubr.bf16.gmra.mrb[0].mxu0 %v953
        %v1044 = vpop.f32.mrb[0].mxu0
        %v1045 = vadd.f32 0.0, %v1044
        %v1046 = vpop.f32.mrb[0].mxu0
        %v1047 = vpop.f32.mrb[0].mxu0
        %v1048 = vadd.f32 0.0, %v1047
        %v1049 = vpop.f32.mrb[0].mxu0
        %1050 = vmatprep.mubr.bf16.mxu0 0
        %1051 = vmatmul.mubr.bf16.gmra.mrb[0].mxu0 %v956
        %v1052 = vpop.f32.mrb[0].mxu0
        %v1053 = vadd.f32 0.0, %v1052
        %v1054 = vpop.f32.mrb[0].mxu0
        %v1055 = vpop.f32.mrb[0].mxu0
        %v1056 = vadd.f32 0.0, %v1055
        %v1057 = vpop.f32.mrb[0].mxu0
        %1058 = vdwg.mxu0
        %vm1059 = vcmask 261120
        %1060 = vst.msk [vmem:[#allocation4] sm:$0xff] %vm1059, %v997
        %1061 = vst.msk [vmem:[#allocation4 + $0x8] sm:$0xff] %vm1059, %v1000
        %1062 = vst.msk [vmem:[#allocation4 + $0x10] sm:$0xff] %vm1059, %v1005
        %1063 = vst.msk [vmem:[#allocation4 + $0x18] sm:$0xff] %vm1059, %v1008
        %1064 = vst.msk [vmem:[#allocation4 + $0x20] sm:$0xff] %vm1059, %v1013
        %1065 = vst.msk [vmem:[#allocation4 + $0x28] sm:$0xff] %vm1059, %v1016
        %1066 = vst.msk [vmem:[#allocation4 + $0x30] sm:$0xff] %vm1059, %v1021
        %1067 = vst.msk [vmem:[#allocation4 + $0x38] sm:$0xff] %vm1059, %v1024
        %1068 = vst.msk [vmem:[#allocation4 + $0x40] sm:$0xff] %vm1059, %v1029
        %1069 = vst.msk [vmem:[#allocation4 + $0x48] sm:$0xff] %vm1059, %v1032
        %1070 = vst.msk [vmem:[#allocation4 + $0x50] sm:$0xff] %vm1059, %v1037
        %1071 = vst.msk [vmem:[#allocation4 + $0x58] sm:$0xff] %vm1059, %v1040
        %1072 = vst.msk [vmem:[#allocation4 + $0x60] sm:$0xff] %vm1059, %v1045
        %1073 = vst.msk [vmem:[#allocation4 + $0x68] sm:$0xff] %vm1059, %v1048
        %1074 = vst.msk [vmem:[#allocation4 + $0x70] sm:$0xff] %vm1059, %v1053
        %1075 = vst.msk [vmem:[#allocation4 + $0x78] sm:$0xff] %vm1059, %v1056
        %v1076 = vld [vmem:[#allocation4] sm:$0xff]
        %v1077 = vld [vmem:[#allocation4 + $0x8] sm:$0xff]
        %v1078 = vld [vmem:[#allocation4 + $0x10] sm:$0xff]
        %v1079 = vld [vmem:[#allocation4 + $0x18] sm:$0xff]
        %v1080 = vld [vmem:[#allocation4 + $0x20] sm:$0xff]
        %v1081 = vld [vmem:[#allocation4 + $0x28] sm:$0xff]
        %v1082 = vld [vmem:[#allocation4 + $0x30] sm:$0xff]
        %v1083 = vld [vmem:[#allocation4 + $0x38] sm:$0xff]
        %v1084 = vld [vmem:[#allocation4 + $0x40] sm:$0xff]
        %v1085 = vld [vmem:[#allocation4 + $0x48] sm:$0xff]
        %v1086 = vld [vmem:[#allocation4 + $0x50] sm:$0xff]
        %v1087 = vld [vmem:[#allocation4 + $0x58] sm:$0xff]
        %v1088 = vld [vmem:[#allocation4 + $0x60] sm:$0xff]
        %v1089 = vld [vmem:[#allocation4 + $0x68] sm:$0xff]
        %v1090 = vld [vmem:[#allocation4 + $0x70] sm:$0xff]
        %v1091 = vld [vmem:[#allocation4 + $0x78] sm:$0xff]
        %v1092 = vld [vmem:[#allocation3 + $0x10] sm:$0xff]
        %v1093 = vld [vmem:[#allocation3 + $0x18] sm:$0xff]
        %v1094 = vld [vmem:[#allocation3 + $0x20] sm:$0xff]
        %v1095 = vld [vmem:[#allocation3 + $0x28] sm:$0xff]
        %v1096 = vld [vmem:[#allocation3 + $0x30] sm:$0xff]
        %v1097 = vld [vmem:[#allocation3 + $0x38] sm:$0xff]
        %v1098 = vld [vmem:[#allocation3 + $0x40] sm:$0xff]
        %v1099 = vld [vmem:[#allocation3 + $0x48] sm:$0xff]
        %s1100 = scalar_lea.vmem %s3, 12
        %v1101 = vld [vmem:[%s1100] sm:$0xf]
        %v1102 = vld [vmem:[%s1100 + $0x4] sm:$0xf]
        %v1103 = vld [vmem:[%s1100 + $0x8] sm:$0xf]
        %v1107 = vunpack.c.l.b16 %v1101
        %v1108 = vunpack.c.l.b16 %v1102
        %v1109 = vunpack.c.l.b16 %v1103
        %v1110 = vpack.c.b16 %v1108, %v1107
        %v1111 = vpack.c.b16 %v1109, %v1109
        %v1114 = vsel %vm933, %v1092, 0
        %v1117 = vsel %vm933, %v1093, 0
        %v1120 = vsel %vm933, %v1094, 0
        %v1123 = vsel %vm933, %v1095, 0
        %v1126 = vsel %vm933, %v1096, 0
        %v1129 = vsel %vm933, %v1097, 0
        %v1132 = vsel %vm933, %v1098, 0
        %v1135 = vsel %vm933, %v1099, 0
        %v1138 = vsel %vm958, %v1111, 0
        %1140 = vmatprep.subr.bf16.mxu0 0
        %1141 = vmatpush1.bf16.msra.mxu0 %v1110
        %1142 = vmatprep.subr.bf16.mxu0 0
        %1143 = vmatpush1.bf16.msra.mxu0 %v1138
        %1144 = vmatprep.subr.bf16.mxu0 0
        %1145 = vmatpush1.bf16.msra.mxu0 0
        %1146 = vmatprep.subr.bf16.mxu0 0
        %1147 = vmatpush1.bf16.msra.mxu0 0
        %1148 = vmatprep.subr.bf16.mxu0 0
        %1149 = vmatpush1.bf16.msra.mxu0 0
        %1150 = vmatprep.subr.bf16.mxu0 0
        %1151 = vmatpush1.bf16.msra.mxu0 0
        %1152 = vmatprep.subr.bf16.mxu0 0
        %1153 = vmatpush1.bf16.msra.mxu0 0
        %1154 = vmatprep.subr.bf16.mxu0 0
        %1155 = vmatpush1.bf16.msra.mxu0 0
        %1156 = vmatprep.subr.bf16.mxu0 0
        %1157 = vmatpush1.bf16.msra.mxu0 0
        %1158 = vmatprep.subr.bf16.mxu0 0
        %1159 = vmatpush1.bf16.msra.mxu0 0
        %1160 = vmatprep.subr.bf16.mxu0 0
        %1161 = vmatpush1.bf16.msra.mxu0 0
        %1162 = vmatprep.subr.bf16.mxu0 0
        %1163 = vmatpush1.bf16.msra.mxu0 0
        %1164 = vmatprep.subr.bf16.mxu0 0
        %1165 = vmatpush1.bf16.msra.mxu0 0
        %1166 = vmatprep.subr.bf16.mxu0 0
        %1167 = vmatpush1.bf16.msra.mxu0 0
        %1168 = vmatprep.subr.bf16.mxu0 0
        %1169 = vmatpush1.bf16.msra.mxu0 0
        %1170 = vmatprep.subr.bf16.mxu0 0
        %1171 = vmatpush1.bf16.msra.mxu0 0
        %1172 = vmatprep.mubr.bf16.mxu0 0
        %1173 = vmatmul.mubr.bf16.gmra.mrb[0].mxu0 %v1114
        %v1174 = vpop.f32.mrb[0].mxu0
        %v1175 = vadd.f32 0.0, %v1174
        %v1176 = vpop.f32.mrb[0].mxu0
        %v1177 = vpop.f32.mrb[0].mxu0
        %v1178 = vadd.f32 0.0, %v1177
        %v1179 = vpop.f32.mrb[0].mxu0
        %1180 = vmatprep.mubr.bf16.mxu0 0
        %1181 = vmatmul.mubr.bf16.gmra.mrb[0].mxu0 %v1117
        %v1182 = vpop.f32.mrb[0].mxu0
        %v1183 = vadd.f32 0.0, %v1182
        %v1184 = vpop.f32.mrb[0].mxu0
        %v1185 = vpop.f32.mrb[0].mxu0
        %v1186 = vadd.f32 0.0, %v1185
        %v1187 = vpop.f32.mrb[0].mxu0
        %1188 = vmatprep.mubr.bf16.mxu0 0
        %1189 = vmatmul.mubr.bf16.gmra.mrb[0].mxu0 %v1120
        %v1190 = vpop.f32.mrb[0].mxu0
        %v1191 = vadd.f32 0.0, %v1190
        %v1192 = vpop.f32.mrb[0].mxu0
        %v1193 = vpop.f32.mrb[0].mxu0
        %v1194 = vadd.f32 0.0, %v1193
        %v1195 = vpop.f32.mrb[0].mxu0
        %1196 = vmatprep.mubr.bf16.mxu0 0
        %1197 = vmatmul.mubr.bf16.gmra.mrb[0].mxu0 %v1123
        %v1198 = vpop.f32.mrb[0].mxu0
        %v1199 = vadd.f32 0.0, %v1198
        %v1200 = vpop.f32.mrb[0].mxu0
        %v1201 = vpop.f32.mrb[0].mxu0
        %v1202 = vadd.f32 0.0, %v1201
        %v1203 = vpop.f32.mrb[0].mxu0
        %1204 = vmatprep.mubr.bf16.mxu0 0
        %1205 = vmatmul.mubr.bf16.gmra.mrb[0].mxu0 %v1126
        %v1206 = vpop.f32.mrb[0].mxu0
        %v1207 = vadd.f32 0.0, %v1206
        %v1208 = vpop.f32.mrb[0].mxu0
        %v1209 = vpop.f32.mrb[0].mxu0
        %v1210 = vadd.f32 0.0, %v1209
        %v1211 = vpop.f32.mrb[0].mxu0
        %1212 = vmatprep.mubr.bf16.mxu0 0
        %1213 = vmatmul.mubr.bf16.gmra.mrb[0].mxu0 %v1129
        %v1214 = vpop.f32.mrb[0].mxu0
        %v1215 = vadd.f32 0.0, %v1214
        %v1216 = vpop.f32.mrb[0].mxu0
        %v1217 = vpop.f32.mrb[0].mxu0
        %v1218 = vadd.f32 0.0, %v1217
        %v1219 = vpop.f32.mrb[0].mxu0
        %1220 = vmatprep.mubr.bf16.mxu0 0
        %1221 = vmatmul.mubr.bf16.gmra.mrb[0].mxu0 %v1132
        %v1222 = vpop.f32.mrb[0].mxu0
        %v1223 = vadd.f32 0.0, %v1222
        %v1224 = vpop.f32.mrb[0].mxu0
        %v1225 = vpop.f32.mrb[0].mxu0
        %v1226 = vadd.f32 0.0, %v1225
        %v1227 = vpop.f32.mrb[0].mxu0
        %1228 = vmatprep.mubr.bf16.mxu0 0
        %1229 = vmatmul.mubr.bf16.gmra.mrb[0].mxu0 %v1135
        %v1230 = vpop.f32.mrb[0].mxu0
        %v1231 = vadd.f32 0.0, %v1230
        %v1232 = vpop.f32.mrb[0].mxu0
        %v1233 = vpop.f32.mrb[0].mxu0
        %v1234 = vadd.f32 0.0, %v1233
        %v1235 = vpop.f32.mrb[0].mxu0
        %1236 = vdwg.mxu0
        %v1237 = vadd.f32 %v1076, %v1175
        %v1238 = vadd.f32 %v1077, %v1178
        %v1239 = vadd.f32 %v1078, %v1183
        %v1240 = vadd.f32 %v1079, %v1186
        %v1241 = vadd.f32 %v1080, %v1191
        %v1242 = vadd.f32 %v1081, %v1194
        %v1243 = vadd.f32 %v1082, %v1199
        %v1244 = vadd.f32 %v1083, %v1202
        %v1245 = vadd.f32 %v1084, %v1207
        %v1246 = vadd.f32 %v1085, %v1210
        %v1247 = vadd.f32 %v1086, %v1215
        %v1248 = vadd.f32 %v1087, %v1218
        %v1249 = vadd.f32 %v1088, %v1223
        %v1250 = vadd.f32 %v1089, %v1226
        %v1251 = vadd.f32 %v1090, %v1231
        %v1252 = vadd.f32 %v1091, %v1234
        %1253 = vst.msk [vmem:[#allocation4] sm:$0xff] %vm1059, %v1237
        %1254 = vst.msk [vmem:[#allocation4 + $0x8] sm:$0xff] %vm1059, %v1238
        %1255 = vst.msk [vmem:[#allocation4 + $0x10] sm:$0xff] %vm1059, %v1239
        %1256 = vst.msk [vmem:[#allocation4 + $0x18] sm:$0xff] %vm1059, %v1240
        %1257 = vst.msk [vmem:[#allocation4 + $0x20] sm:$0xff] %vm1059, %v1241
        %1258 = vst.msk [vmem:[#allocation4 + $0x28] sm:$0xff] %vm1059, %v1242
        %1259 = vst.msk [vmem:[#allocation4 + $0x30] sm:$0xff] %vm1059, %v1243
        %1260 = vst.msk [vmem:[#allocation4 + $0x38] sm:$0xff] %vm1059, %v1244
        %1261 = vst.msk [vmem:[#allocation4 + $0x40] sm:$0xff] %vm1059, %v1245
        %1262 = vst.msk [vmem:[#allocation4 + $0x48] sm:$0xff] %vm1059, %v1246
        %1263 = vst.msk [vmem:[#allocation4 + $0x50] sm:$0xff] %vm1059, %v1247
        %1264 = vst.msk [vmem:[#allocation4 + $0x58] sm:$0xff] %vm1059, %v1248
        %1265 = vst.msk [vmem:[#allocation4 + $0x60] sm:$0xff] %vm1059, %v1249
        %1266 = vst.msk [vmem:[#allocation4 + $0x68] sm:$0xff] %vm1059, %v1250
        %1267 = vst.msk [vmem:[#allocation4 + $0x70] sm:$0xff] %vm1059, %v1251
        %1268 = vst.msk [vmem:[#allocation4 + $0x78] sm:$0xff] %vm1059, %v1252
        %v1269 = vld [vmem:[#allocation4] sm:$0xff]
        %v1270 = vld [vmem:[#allocation4 + $0x8] sm:$0xff]
        %v1271 = vld [vmem:[#allocation4 + $0x10] sm:$0xff]
        %v1272 = vld [vmem:[#allocation4 + $0x18] sm:$0xff]
        %v1273 = vld [vmem:[#allocation4 + $0x20] sm:$0xff]
        %v1274 = vld [vmem:[#allocation4 + $0x28] sm:$0xff]
        %v1275 = vld [vmem:[#allocation4 + $0x30] sm:$0xff]
        %v1276 = vld [vmem:[#allocation4 + $0x38] sm:$0xff]
        %v1277 = vld [vmem:[#allocation4 + $0x40] sm:$0xff]
        %v1278 = vld [vmem:[#allocation4 + $0x48] sm:$0xff]
        %v1279 = vld [vmem:[#allocation4 + $0x50] sm:$0xff]
        %v1280 = vld [vmem:[#allocation4 + $0x58] sm:$0xff]
        %v1281 = vld [vmem:[#allocation4 + $0x60] sm:$0xff]
        %v1282 = vld [vmem:[#allocation4 + $0x68] sm:$0xff]
        %v1283 = vld [vmem:[#allocation4 + $0x70] sm:$0xff]
        %v1284 = vld [vmem:[#allocation4 + $0x78] sm:$0xff]
        %v1285 = vld [vmem:[#allocation3 + $0x20] sm:$0xff]
        %v1286 = vld [vmem:[#allocation3 + $0x28] sm:$0xff]
        %v1287 = vld [vmem:[#allocation3 + $0x30] sm:$0xff]
        %v1288 = vld [vmem:[#allocation3 + $0x38] sm:$0xff]
        %v1289 = vld [vmem:[#allocation3 + $0x40] sm:$0xff]
        %v1290 = vld [vmem:[#allocation3 + $0x48] sm:$0xff]
        %v1291 = vld [vmem:[#allocation3 + $0x50] sm:$0xff]
        %v1292 = vld [vmem:[#allocation3 + $0x58] sm:$0xff]
        %s1293 = scalar_lea.vmem %s3, 24
        %v1294 = vld [vmem:[%s1293] sm:$0xf]
        %v1295 = vld [vmem:[%s1293 + $0x4] sm:$0xf]
        %v1296 = vld [vmem:[%s1293 + $0x8] sm:$0xf]
        %v1300 = vunpack.c.l.b16 %v1294
        %v1301 = vunpack.c.l.b16 %v1295
        %v1302 = vunpack.c.l.b16 %v1296
        %v1303 = vpack.c.b16 %v1301, %v1300
        %v1304 = vpack.c.b16 %v1302, %v1302
        %v1307 = vsel %vm933, %v1285, 0
        %v1310 = vsel %vm933, %v1286, 0
        %v1313 = vsel %vm933, %v1287, 0
        %v1316 = vsel %vm933, %v1288, 0
        %v1319 = vsel %vm933, %v1289, 0
        %v1322 = vsel %vm933, %v1290, 0
        %v1325 = vsel %vm933, %v1291, 0
        %v1328 = vsel %vm933, %v1292, 0
        %v1331 = vsel %vm958, %v1304, 0
        %1333 = vmatprep.subr.bf16.mxu0 0
        %1334 = vmatpush1.bf16.msra.mxu0 %v1303
        %1335 = vmatprep.subr.bf16.mxu0 0
        %1336 = vmatpush1.bf16.msra.mxu0 %v1331
        %1337 = vmatprep.subr.bf16.mxu0 0
        %1338 = vmatpush1.bf16.msra.mxu0 0
        %1339 = vmatprep.subr.bf16.mxu0 0
        %1340 = vmatpush1.bf16.msra.mxu0 0
        %1341 = vmatprep.subr.bf16.mxu0 0
        %1342 = vmatpush1.bf16.msra.mxu0 0
        %1343 = vmatprep.subr.bf16.mxu0 0
        %1344 = vmatpush1.bf16.msra.mxu0 0
        %1345 = vmatprep.subr.bf16.mxu0 0
        %1346 = vmatpush1.bf16.msra.mxu0 0
        %1347 = vmatprep.subr.bf16.mxu0 0
        %1348 = vmatpush1.bf16.msra.mxu0 0
        %1349 = vmatprep.subr.bf16.mxu0 0
        %1350 = vmatpush1.bf16.msra.mxu0 0
        %1351 = vmatprep.subr.bf16.mxu0 0
        %1352 = vmatpush1.bf16.msra.mxu0 0
        %1353 = vmatprep.subr.bf16.mxu0 0
        %1354 = vmatpush1.bf16.msra.mxu0 0
        %1355 = vmatprep.subr.bf16.mxu0 0
        %1356 = vmatpush1.bf16.msra.mxu0 0
        %1357 = vmatprep.subr.bf16.mxu0 0
        %1358 = vmatpush1.bf16.msra.mxu0 0
        %1359 = vmatprep.subr.bf16.mxu0 0
        %1360 = vmatpush1.bf16.msra.mxu0 0
        %1361 = vmatprep.subr.bf16.mxu0 0
        %1362 = vmatpush1.bf16.msra.mxu0 0
        %1363 = vmatprep.subr.bf16.mxu0 0
        %1364 = vmatpush1.bf16.msra.mxu0 0
        %1365 = vmatprep.mubr.bf16.mxu0 0
        %1366 = vmatmul.mubr.bf16.gmra.mrb[0].mxu0 %v1307
        %v1367 = vpop.f32.mrb[0].mxu0
        %v1368 = vadd.f32 0.0, %v1367
        %v1369 = vpop.f32.mrb[0].mxu0
        %v1370 = vpop.f32.mrb[0].mxu0
        %v1371 = vadd.f32 0.0, %v1370
        %v1372 = vpop.f32.mrb[0].mxu0
        %1373 = vmatprep.mubr.bf16.mxu0 0
        %1374 = vmatmul.mubr.bf16.gmra.mrb[0].mxu0 %v1310
        %v1375 = vpop.f32.mrb[0].mxu0
        %v1376 = vadd.f32 0.0, %v1375
        %v1377 = vpop.f32.mrb[0].mxu0
        %v1378 = vpop.f32.mrb[0].mxu0
        %v1379 = vadd.f32 0.0, %v1378
        %v1380 = vpop.f32.mrb[0].mxu0
        %1381 = vmatprep.mubr.bf16.mxu0 0
        %1382 = vmatmul.mubr.bf16.gmra.mrb[0].mxu0 %v1313
        %v1383 = vpop.f32.mrb[0].mxu0
        %v1384 = vadd.f32 0.0, %v1383
        %v1385 = vpop.f32.mrb[0].mxu0
        %v1386 = vpop.f32.mrb[0].mxu0
        %v1387 = vadd.f32 0.0, %v1386
        %v1388 = vpop.f32.mrb[0].mxu0
        %1389 = vmatprep.mubr.bf16.mxu0 0
        %1390 = vmatmul.mubr.bf16.gmra.mrb[0].mxu0 %v1316
        %v1391 = vpop.f32.mrb[0].mxu0
        %v1392 = vadd.f32 0.0, %v1391
        %v1393 = vpop.f32.mrb[0].mxu0
        %v1394 = vpop.f32.mrb[0].mxu0
        %v1395 = vadd.f32 0.0, %v1394
        %v1396 = vpop.f32.mrb[0].mxu0
        %1397 = vmatprep.mubr.bf16.mxu0 0
        %1398 = vmatmul.mubr.bf16.gmra.mrb[0].mxu0 %v1319
        %v1399 = vpop.f32.mrb[0].mxu0
        %v1400 = vadd.f32 0.0, %v1399
        %v1401 = vpop.f32.mrb[0].mxu0
        %v1402 = vpop.f32.mrb[0].mxu0
        %v1403 = vadd.f32 0.0, %v1402
        %v1404 = vpop.f32.mrb[0].mxu0
        %1405 = vmatprep.mubr.bf16.mxu0 0
        %1406 = vmatmul.mubr.bf16.gmra.mrb[0].mxu0 %v1322
        %v1407 = vpop.f32.mrb[0].mxu0
        %v1408 = vadd.f32 0.0, %v1407
        %v1409 = vpop.f32.mrb[0].mxu0
        %v1410 = vpop.f32.mrb[0].mxu0
        %v1411 = vadd.f32 0.0, %v1410
        %v1412 = vpop.f32.mrb[0].mxu0
        %1413 = vmatprep.mubr.bf16.mxu0 0
        %1414 = vmatmul.mubr.bf16.gmra.mrb[0].mxu0 %v1325
        %v1415 = vpop.f32.mrb[0].mxu0
        %v1416 = vadd.f32 0.0, %v1415
        %v1417 = vpop.f32.mrb[0].mxu0
        %v1418 = vpop.f32.mrb[0].mxu0
        %v1419 = vadd.f32 0.0, %v1418
        %v1420 = vpop.f32.mrb[0].mxu0
        %1421 = vmatprep.mubr.bf16.mxu0 0
        %1422 = vmatmul.mubr.bf16.gmra.mrb[0].mxu0 %v1328
        %v1423 = vpop.f32.mrb[0].mxu0
        %v1424 = vadd.f32 0.0, %v1423
        %v1425 = vpop.f32.mrb[0].mxu0
        %v1426 = vpop.f32.mrb[0].mxu0
        %v1427 = vadd.f32 0.0, %v1426
        %v1428 = vpop.f32.mrb[0].mxu0
        %1429 = vdwg.mxu0
        %v1430 = vadd.f32 %v1269, %v1368
        %v1431 = vadd.f32 %v1270, %v1371
        %v1432 = vadd.f32 %v1271, %v1376
        %v1433 = vadd.f32 %v1272, %v1379
        %v1434 = vadd.f32 %v1273, %v1384
        %v1435 = vadd.f32 %v1274, %v1387
        %v1436 = vadd.f32 %v1275, %v1392
        %v1437 = vadd.f32 %v1276, %v1395
        %v1438 = vadd.f32 %v1277, %v1400
        %v1439 = vadd.f32 %v1278, %v1403
        %v1440 = vadd.f32 %v1279, %v1408
        %v1441 = vadd.f32 %v1280, %v1411
        %v1442 = vadd.f32 %v1281, %v1416
        %v1443 = vadd.f32 %v1282, %v1419
        %v1444 = vadd.f32 %v1283, %v1424
        %v1445 = vadd.f32 %v1284, %v1427
        %1446 = vst.msk [vmem:[#allocation4] sm:$0xff] %vm1059, %v1430
        %1447 = vst.msk [vmem:[#allocation4 + $0x8] sm:$0xff] %vm1059, %v1431
        %1448 = vst.msk [vmem:[#allocation4 + $0x10] sm:$0xff] %vm1059, %v1432
        %1449 = vst.msk [vmem:[#allocation4 + $0x18] sm:$0xff] %vm1059, %v1433
        %1450 = vst.msk [vmem:[#allocation4 + $0x20] sm:$0xff] %vm1059, %v1434
        %1451 = vst.msk [vmem:[#allocation4 + $0x28] sm:$0xff] %vm1059, %v1435
        %1452 = vst.msk [vmem:[#allocation4 + $0x30] sm:$0xff] %vm1059, %v1436
        %1453 = vst.msk [vmem:[#allocation4 + $0x38] sm:$0xff] %vm1059, %v1437
        %1454 = vst.msk [vmem:[#allocation4 + $0x40] sm:$0xff] %vm1059, %v1438
        %1455 = vst.msk [vmem:[#allocation4 + $0x48] sm:$0xff] %vm1059, %v1439
        %1456 = vst.msk [vmem:[#allocation4 + $0x50] sm:$0xff] %vm1059, %v1440
        %1457 = vst.msk [vmem:[#allocation4 + $0x58] sm:$0xff] %vm1059, %v1441
        %1458 = vst.msk [vmem:[#allocation4 + $0x60] sm:$0xff] %vm1059, %v1442
        %1459 = vst.msk [vmem:[#allocation4 + $0x68] sm:$0xff] %vm1059, %v1443
        %1460 = vst.msk [vmem:[#allocation4 + $0x70] sm:$0xff] %vm1059, %v1444
        %1461 = vst.msk [vmem:[#allocation4 + $0x78] sm:$0xff] %vm1059, %v1445
        %v1462 = vld [vmem:[#allocation4] sm:$0xff]
        %v1463 = vld [vmem:[#allocation4 + $0x8] sm:$0xff]
        %v1464 = vld [vmem:[#allocation4 + $0x10] sm:$0xff]
        %v1465 = vld [vmem:[#allocation4 + $0x18] sm:$0xff]
        %v1466 = vld [vmem:[#allocation4 + $0x20] sm:$0xff]
        %v1467 = vld [vmem:[#allocation4 + $0x28] sm:$0xff]
        %v1468 = vld [vmem:[#allocation4 + $0x30] sm:$0xff]
        %v1469 = vld [vmem:[#allocation4 + $0x38] sm:$0xff]
        %v1470 = vld [vmem:[#allocation4 + $0x40] sm:$0xff]
        %v1471 = vld [vmem:[#allocation4 + $0x48] sm:$0xff]
        %v1472 = vld [vmem:[#allocation4 + $0x50] sm:$0xff]
        %v1473 = vld [vmem:[#allocation4 + $0x58] sm:$0xff]
        %v1474 = vld [vmem:[#allocation4 + $0x60] sm:$0xff]
        %v1475 = vld [vmem:[#allocation4 + $0x68] sm:$0xff]
        %v1476 = vld [vmem:[#allocation4 + $0x70] sm:$0xff]
        %v1477 = vld [vmem:[#allocation4 + $0x78] sm:$0xff]
        %v1478 = vld [vmem:[%s4] sm:$0x1]
        %v1480 = vlaneseq
        %v1481 = vshrl.u32 %v1480, 7
        %v1482 = vsub.s32 0, %v1481
        %v1483 = vrot.slane %v1478, %v1482
        %v1485 = vadd.f32 %v1462, %v1483
        %v1486 = vadd.f32 %v1463, %v1483
        %v1487 = vadd.f32 %v1464, %v1483
        %v1488 = vadd.f32 %v1465, %v1483
        %v1489 = vadd.f32 %v1466, %v1483
        %v1490 = vadd.f32 %v1467, %v1483
        %v1491 = vadd.f32 %v1468, %v1483
        %v1492 = vadd.f32 %v1469, %v1483
        %v1493 = vadd.f32 %v1470, %v1483
        %v1494 = vadd.f32 %v1471, %v1483
        %v1495 = vadd.f32 %v1472, %v1483
        %v1496 = vadd.f32 %v1473, %v1483
        %v1497 = vadd.f32 %v1474, %v1483
        %v1498 = vadd.f32 %v1475, %v1483
        %v1499 = vadd.f32 %v1476, %v1483
        %v1500 = vadd.f32 %v1477, %v1483
        %v1501 = vmax.f32 %v1485, 0.0
        %v1502 = vmax.f32 %v1486, 0.0
        %v1503 = vmax.f32 %v1487, 0.0
        %v1504 = vmax.f32 %v1488, 0.0
        %v1505 = vmax.f32 %v1489, 0.0
        %v1506 = vmax.f32 %v1490, 0.0
        %v1507 = vmax.f32 %v1491, 0.0
        %v1508 = vmax.f32 %v1492, 0.0
        %v1509 = vmax.f32 %v1493, 0.0
        %v1510 = vmax.f32 %v1494, 0.0
        %v1511 = vmax.f32 %v1495, 0.0
        %v1512 = vmax.f32 %v1496, 0.0
        %v1513 = vmax.f32 %v1497, 0.0
        %v1514 = vmax.f32 %v1498, 0.0
        %v1515 = vmax.f32 %v1499, 0.0
        %v1516 = vmax.f32 %v1500, 0.0
        %v1517 = vpack.c.bf16 %v1502, %v1501
        %v1518 = vpack.c.bf16 %v1504, %v1503
        %v1519 = vpack.c.bf16 %v1506, %v1505
        %v1520 = vpack.c.bf16 %v1508, %v1507
        %v1521 = vpack.c.bf16 %v1510, %v1509
        %v1522 = vpack.c.bf16 %v1512, %v1511
        %v1523 = vpack.c.bf16 %v1514, %v1513
        %v1524 = vpack.c.bf16 %v1516, %v1515
        %v1525 = vlaneseq
        %v1526 = vshrl.u32 %v1525, 7
        %v1527 = vadd.s32 %v1526, 8
        %v1528 = vadd.s32 %v1526, 16
        %v1529 = vadd.s32 %v1526, 24
        %vm1530 = vcmp.lt.s32.totalorder %v1526, 20
        %vm1531 = vcmp.lt.s32.totalorder %v1527, 20
        %vm1532 = vcmp.lt.s32.totalorder %v1528, 20
        %vm1533 = vcmp.lt.s32.totalorder %v1529, 20
        %v1534 = vsel %vm1530, 1, 0
        %v1535 = vsel %vm1531, 1, 0
        %v1536 = vsel %vm1532, 1, 0
        %v1537 = vsel %vm1533, 1, 0
        %vm1538 = vcmp.eq.s32.totalorder %v1534, 1
        %vm1539 = vcmp.eq.s32.totalorder %v1535, 1
        %vm1540 = vcmp.eq.s32.totalorder %v1536, 1
        %vm1541 = vcmp.eq.s32.totalorder %v1537, 1
        %vm1542 = vmpackc.low %vm1538, %vm1538
        %vm1543 = vmpackc.low %vm1539, %vm1539
        %vm1544 = vmpackc.low %vm1540, %vm1540
        %vm1545 = vmpackc.low %vm1541, %vm1541
        %v1546 = vsel %vm1542, 65537, 0
        %v1547 = vsel %vm1543, 65537, 0
        %v1548 = vsel %vm1544, 65537, 0
        %v1549 = vsel %vm1545, 65537, 0
        %v1550 = vunpack.c.l.b16 %v1546
        %v1551 = vunpack.c.l.b16 %v1547
        %v1552 = vunpack.c.l.b16 %v1548
        %v1553 = vunpack.c.l.b16 %v1549
        %v1554 = vpack.c.b16 %v1551, %v1550
        %v1555 = vpack.c.b16 %v1553, %v1552
        %vm1556 = vcmp.ne.s16.totalorder %v1554, 0
        %vm1557 = vcmp.ne.s16.totalorder %v1555, 0
        %v1558 = vsel %vm1556, %v1517, 0
        %v1559 = vsel %vm1557, %v1518, 0
        %v1560 = vsel %vm1556, %v1519, 0
        %v1561 = vsel %vm1557, %v1520, 0
        %v1562 = vsel %vm1556, %v1521, 0
        %v1563 = vsel %vm1557, %v1522, 0
        %v1564 = vsel %vm1556, %v1523, 0
        %v1565 = vsel %vm1557, %v1524, 0
        %v1574 = vunpack.c.l.b16 %v1558
        %v1575 = vunpack.c.h.b16 %v1558
        %v1576 = vunpack.c.l.b16 %v1559
        %v1577 = vunpack.c.h.b16 %v1559
        %v1578 = vunpack.c.l.b16 %v1560
        %v1579 = vunpack.c.h.b16 %v1560
        %v1580 = vunpack.c.l.b16 %v1561
        %v1581 = vunpack.c.h.b16 %v1561
        %v1582 = vunpack.c.l.b16 %v1562
        %v1583 = vunpack.c.h.b16 %v1562
        %v1584 = vunpack.c.l.b16 %v1563
        %v1585 = vunpack.c.h.b16 %v1563
        %v1586 = vunpack.c.l.b16 %v1564
        %v1587 = vunpack.c.h.b16 %v1564
        %v1588 = vunpack.c.l.b16 %v1565
        %v1589 = vunpack.c.h.b16 %v1565
        %v1590 = vpack.c.b16 %v1574, %v1574
        %v1591 = vpack.c.b16 %v1575, %v1575
        %v1592 = vpack.c.b16 %v1576, %v1576
        %v1593 = vpack.c.b16 %v1577, %v1577
        %v1594 = vpack.c.b16 %v1578, %v1578
        %v1595 = vpack.c.b16 %v1579, %v1579
        %v1596 = vpack.c.b16 %v1580, %v1580
        %v1597 = vpack.c.b16 %v1581, %v1581
        %v1598 = vpack.c.b16 %v1582, %v1582
        %v1599 = vpack.c.b16 %v1583, %v1583
        %v1600 = vpack.c.b16 %v1584, %v1584
        %v1601 = vpack.c.b16 %v1585, %v1585
        %v1602 = vpack.c.b16 %v1586, %v1586
        %v1603 = vpack.c.b16 %v1587, %v1587
        %v1604 = vpack.c.b16 %v1588, %v1588
        %v1605 = vpack.c.b16 %v1589, %v1589
        %vm1622 = vcmask 257024
        %1623 = vst.msk [vmem:[%s334] sm:$0xf] %vm1622, %v1590
        %1624 = vst.msk [vmem:[%s334 + $0x4] sm:$0xf] %vm1622, %v1591
        %1625 = vst.msk [vmem:[%s334 + $0x8] sm:$0xf] %vm1622, %v1592
        %1626 = vst.msk [vmem:[%s334 + $0xc] sm:$0xf] %vm1622, %v1593
        %1627 = vst.msk [vmem:[%s334 + $0x10] sm:$0xf] %vm1622, %v1594
        %1628 = vst.msk [vmem:[%s334 + $0x14] sm:$0xf] %vm1622, %v1595
        %1629 = vst.msk [vmem:[%s334 + $0x18] sm:$0xf] %vm1622, %v1596
        %1630 = vst.msk [vmem:[%s334 + $0x1c] sm:$0xf] %vm1622, %v1597
        %1631 = vst.msk [vmem:[%s334 + $0x20] sm:$0xf] %vm1622, %v1598
        %1632 = vst.msk [vmem:[%s334 + $0x24] sm:$0xf] %vm1622, %v1599
        %1633 = vst.msk [vmem:[%s334 + $0x28] sm:$0xf] %vm1622, %v1600
        %1634 = vst.msk [vmem:[%s334 + $0x2c] sm:$0xf] %vm1622, %v1601
        %1635 = vst.msk [vmem:[%s334 + $0x30] sm:$0xf] %vm1622, %v1602
        %1636 = vst.msk [vmem:[%s334 + $0x34] sm:$0xf] %vm1622, %v1603
        %1637 = vst.msk [vmem:[%s334 + $0x38] sm:$0xf] %vm1622, %v1604
        %1638 = vst.msk [vmem:[%s334 + $0x3c] sm:$0xf] %vm1622, %v1605
        %s1639 = sand.u32 %s183, 1
        %s1640 = scalar_lea.sflag [#allocation6], %s1639
        %s1641 = sand.u32 %s183, 1
        %s1642 = smul.addr %s1641, 64
        %s1643 = scalar_lea.vmem [#allocation5], %s1642
        // Predicated region
        $region41: #{tpu_custom_call.1} parent=39 // pred_check
          %p1644 = pneg %p193
        $region42: #{tpu_custom_call.1} parent=39 // pred_check_branch
          %1646 = sbr.rel (%p1644) target = $region44
        $region43: #{tpu_custom_call.1} parent=39 // pred_region
          %s1647 = smul.u32 4, %s24
          %s1649 = ssub.s32 1024, 1024
          %1650 = vsyncadd %s1640, %s1649
          %s1651 = smul.addr %s1647, 4
          %s1652 = smul.addr %s23, 48
          %s1653 = sadd.s32 %s1651, %s1652
          %s1654 = smul.addr %s1653, 64
          %s1655 = scalar_lea.hbm %s5, %s1654
          %s1656 = sshll.u32 %s1643, 4
          %s1657 = int_to_ptr.vmem [resolvable:$true] %s1656
          %1662 = dma.vmem_to_hbm [thread:$0]  %s1657, 1024, %s1655, %s1640, 64, 64, 4
        $region44: #{tpu_custom_call.1} parent=39 // pred_fallthru
          _
      $region40: #{tpu_custom_call.1} parent=5 // pred_fallthru
        _
      %p1663 = scmp.le.s32.totalorder 2, %s14
      // Predicated region
      $region45: #{tpu_custom_call.1} parent=5 // pred_check
        %p1664 = pneg %p1663
      $region46: #{tpu_custom_call.1} parent=5 // pred_check_branch
        %1666 = sbr.rel (%p1664) target = $region48
      $region47: #{tpu_custom_call.1} parent=5 // pred_region
        %s1667 = ssub.s32 %s14, 2
        // Predicated region
        $region49: #{tpu_custom_call.1} parent=47 // pred_check
          %p1668 = pneg %p199
        $region50: #{tpu_custom_call.1} parent=47 // pred_check_branch
          %1670 = sbr.rel (%p1668) target = $region52
        $region51: #{tpu_custom_call.1} parent=47 // pred_region
          %s1671 = sand.u32 %s184, 1
          %s1672 = scalar_lea.sflag [#allocation6], %s1671
          %s1673 = sand.u32 %s184, 1
          %s1674 = smul.addr %s1673, 64
          %s1675 = scalar_lea.vmem [#allocation5], %s1674
          %1676 = dma.done %s1672, 1024
        $region52: #{tpu_custom_call.1} parent=47 // pred_fallthru
          _
      $region48: #{tpu_custom_call.1} parent=5 // pred_fallthru
        _
    $region6: #{tpu_custom_call.1} parent=1 // loop_footer
      %s18 = sadd.s32 1, %s14
    $region7: #{tpu_custom_call.1} parent=1 // loop_footer_branch
      %13 = sbr.rel target = $region3
    $region8: #{tpu_custom_call.1} parent=1 // loop_exit
      _
    %1677 = vsyncpa [#allocation6], 1
    %s1678 = scalar_lea.sflag [#allocation6], 1
    %1679 = vsyncpa %s1678, 1

</llo_original>
